<compile_context>
chip_gen: v7x
topology: tpu7x:2x2x1
jax: 0.10.0
libtpu: 0.0.40
codegen_flags: <defaults>
</compile_context>

<pallas_src>
import numpy as np
import jax
import jax.numpy as jnp
from jax.experimental import pallas as pl
from jax.experimental.pallas import tpu as pltpu

# ------------------------------- constants --------------------------------- #

LOG_2PI = float(np.log(2.0 * np.pi))
# Isotropic Gaussian prior (the usual isotropic_gauss_prior(mu=0, sigma=0.1)).
PRIOR_MU = 0.0
PRIOR_SIGMA = 0.1
_LOG_PRIOR_SIGMA = float(np.log(PRIOR_SIGMA))
_INV_PRIOR_VAR = float(1.0 / (PRIOR_SIGMA * PRIOR_SIGMA))

# Analytic KL contribution of a padded parameter element (mu=0, p=0, eps=0):
#   std_pad = 1e-6 + softplus(0) ; W_pad = 0.
_STD_PAD = float(1e-6 + np.log(2.0))
_LQW_PAD_PER_ELEM = float(-0.5 * LOG_2PI - np.log(_STD_PAD))
_LPW_PAD_PER_ELEM = float(-0.5 * LOG_2PI - _LOG_PRIOR_SIGMA)


def _softplus(x):
    # Matches F.softplus(x, beta=1, threshold=20).  Plain log(1+exp) keeps the
    # in-kernel lowering to exp+log on the EUP.
    return jnp.where(x > 20.0, x, jnp.log(1.0 + jnp.exp(jnp.minimum(x, 20.0))))


def _round_up(x, m):
    return ((x + m - 1) // m) * m


def _pad2(a, rows, cols):
    pr, pc = rows - a.shape[0], cols - a.shape[1]
    if pr or pc:
        a = jnp.pad(a, ((0, pr), (0, pc)))
    return a


def _pick_tile(dim, preferred):
    """Largest multiple of 128 that divides `dim` (a 128-multiple) and is
    <= preferred (>= 128)."""
    best = 128
    t = 128
    while t <= min(dim, preferred):
        if dim % t == 0:
            best = t
        t += 128
    return best


def _vmem_budget():
    """Scoped-VMEM limit: ~75% of physical per-core VMEM (generation-aware)."""
    cap = 64 << 20  # conservative default (v7x-class: 64 MiB / TensorCore)
    try:
        info = pltpu.get_tpu_info()
        c = getattr(info, "vmem_capacity_bytes", None)
        if c:
            cap = int(c)
    except Exception:
        pass
    return (cap * 3) // 4


def _choose_tiles(M, K_pad, N_pad, budget, n_w_arrays, w_bytes):
    """(tm, tk, tn) such that the double-buffered working set fits the budget."""
    tm = min(_round_up(max(M, 1), 16), 256)          # bf16 sublane tile = 16
    if budget >= (80 << 20):                          # v5e / v6e (128 MiB VMEM)
        tn_pref, tk_pref = 512, 1024
    else:                                             # v7x-class (64 MiB VMEM)
        tn_pref, tk_pref = 256, 512
    tn = _pick_tile(N_pad, tn_pref)
    tk = _pick_tile(K_pad, tk_pref)

    def est(tm_, tk_, tn_):
        x_blk = tm_ * tk_ * 2                         # bf16 X tile
        w_blk = tk_ * tn_ * w_bytes * n_w_arrays      # weight-shaped tiles
        b_blk = tn_ * 4 * 3                           # bias-shaped tiles
        out_blk = tm_ * tn_ * 4
        return 2 * (x_blk + w_blk + b_blk + out_blk) + tm_ * tn_ * 4  # + acc

    while est(tm, tk, tn) > budget // 2:
        if tk > 128:
            tk = _pick_tile(K_pad, tk // 2)
        elif tn > 128:
            tn = _pick_tile(N_pad, tn // 2)
        elif tm > 16:
            tm = max(16, _round_up(tm // 2, 16))
        else:
            break
    return tm, tk, tn


# ----------------------------- Pallas kernels ------------------------------ #

def _make_fused_kernel(num_j, num_k):
    """Fused sampling + KL + matmul + bias kernel.  Grid = (Mi, Nj, Kk)."""
    cte = -0.5 * LOG_2PI

    def kernel(x_ref, w_mu_ref, w_p_ref, eps_w_ref,
               b_mu_ref, b_p_ref, eps_b_ref,
               out_ref, lqw_ref, lpw_ref, acc_ref):
        i = pl.program_id(0)
        j = pl.program_id(1)
        k = pl.program_id(2)

        # ---- sample this (tk, tn) weight tile in f32 ----
        std_w = 1e-6 + _softplus(w_p_ref[...])
        eps_w = eps_w_ref[...]
        w = w_mu_ref[...] + std_w * eps_w

        # ---- MXU: bf16 operands, f32 accumulator ----
        @pl.when(k == 0)
        def _():
            acc_ref[...] = jnp.zeros_like(acc_ref)

        acc_ref[...] += jnp.dot(x_ref[...], w.astype(jnp.bfloat16),
                                preferred_element_type=jnp.float32)

        # ---- KL partials for this weight tile (exactly once, at i == 0) ----
        @pl.when(i == 0)
        def _():
            cnt = float(w.shape[0] * w.shape[1])
            # lqw: (W - W_mu)/std == eps exactly -> no subtract / divide.
            lqw_ref[j * num_k + k] = (cnt * cte
                                      - jnp.sum(jnp.log(std_w))
                                      - 0.5 * jnp.sum(eps_w * eps_w))
            # lpw: prior mu == 0 -> ((W - 0)/sigma)^2 == W*W * (1/sigma^2).
            lpw_ref[j * num_k + k] = (cnt * (cte - _LOG_PRIOR_SIGMA)
                                      - (0.5 * _INV_PRIOR_VAR) * jnp.sum(w * w))

        # ---- KL partials for this bias tile (exactly once per j) ----
        @pl.when((i == 0) & (k == 0))
        def _():
            std_b = 1e-6 + _softplus(b_p_ref[...])
            eps_b = eps_b_ref[...]
            b_s = b_mu_ref[...] + std_b * eps_b
            cnt_b = float(b_s.shape[-1])
            slot = num_j * num_k + j
            lqw_ref[slot] = (cnt_b * cte
                             - jnp.sum(jnp.log(std_b))
                             - 0.5 * jnp.sum(eps_b * eps_b))
            lpw_ref[slot] = (cnt_b * (cte - _LOG_PRIOR_SIGMA)
                             - (0.5 * _INV_PRIOR_VAR) * jnp.sum(b_s * b_s))

        # ---- epilogue: sample bias, add, write output tile ----
        @pl.when(k == num_k - 1)
        def _():
            std_b = 1e-6 + _softplus(b_p_ref[...])
            b_s = b_mu_ref[...] + std_b * eps_b_ref[...]
            out_ref[...] = (acc_ref[...] + b_s).astype(out_ref.dtype)

    return kernel


def _matmul_bias_kernel(x_ref, w_ref, b_ref, o_ref, acc_ref):
    """Deterministic path: out = X @ W + b (bf16 operands, f32 accumulator)."""
    k = pl.program_id(2)

    @pl.when(k == 0)
    def _():
        acc_ref[...] = jnp.zeros_like(acc_ref)

    acc_ref[...] += jnp.dot(x_ref[...], w_ref[...],
                            preferred_element_type=jnp.float32)

    @pl.when(k == pl.num_programs(2) - 1)
    def _():
        o_ref[...] = (acc_ref[...] + b_ref[...]).astype(o_ref.dtype)


# ------------------------------ Host wrappers ------------------------------ #

def _bayes_linear_sampled(X, W_mu, W_p, b_mu, b_p, eps_W, eps_b):
    M, K = X.shape
    Kw, N = W_mu.shape
    assert K == Kw
    K_pad = _round_up(K, 128)
    N_pad = _round_up(N, 128)

    budget = _vmem_budget()
    tm, tk, tn = _choose_tiles(M, K_pad, N_pad, budget, n_w_arrays=3, w_bytes=4)
    M_pad = _round_up(M, tm)
    num_i, num_j, num_k = M_pad // tm, N_pad // tn, K_pad // tk
    num_parts = num_j * num_k + num_j        # weight-tile slots + bias-tile slots

    Xp = _pad2(X, M_pad, K_pad).astype(jnp.bfloat16)
    Wmu = _pad2(W_mu, K_pad, N_pad)
    Wp_ = _pad2(W_p, K_pad, N_pad)
    EW = _pad2(eps_W, K_pad, N_pad)
    bmu = _pad2(b_mu.reshape(1, N), 1, N_pad)
    bp_ = _pad2(b_p.reshape(1, N), 1, N_pad)
    eb = _pad2(eps_b.reshape(1, N), 1, N_pad)

    w_spec = pl.BlockSpec((tk, tn), lambda i, j, k: (k, j))
    b_spec = pl.BlockSpec((1, tn), lambda i, j, k: (0, j))

    out, lqw_parts, lpw_parts = pl.pallas_call(
        _make_fused_kernel(num_j, num_k),
        out_shape=(
            jax.ShapeDtypeStruct((M_pad, N_pad), jnp.float32),
            jax.ShapeDtypeStruct((num_parts,), jnp.float32),
            jax.ShapeDtypeStruct((num_parts,), jnp.float32),
        ),
        grid_spec=pltpu.PrefetchScalarGridSpec(
            num_scalar_prefetch=0,
            grid=(num_i, num_j, num_k),
            in_specs=[
                pl.BlockSpec((tm, tk), lambda i, j, k: (i, k)),   # X (bf16)
                w_spec, w_spec, w_spec,                           # W_mu, W_p, eps_W
                b_spec, b_spec, b_spec,                           # b_mu, b_p, eps_b
            ],
            out_specs=(
                pl.BlockSpec((tm, tn), lambda i, j, k: (i, j)),   # output tile
                pl.BlockSpec(memory_space=pltpu.SMEM),            # lqw partials
                pl.BlockSpec(memory_space=pltpu.SMEM),            # lpw partials
            ),
            scratch_shapes=[pltpu.VMEM((tm, tn), jnp.float32)],
        ),
        compiler_params=pltpu.CompilerParams(
            # KL partials are gated on i == 0 and live in an untiled SMEM
            # output, so every axis stays "arbitrary" (single-writer, correct
            # on 1- and 2-TensorCore chips).
            dimension_semantics=("arbitrary", "arbitrary", "arbitrary"),
            vmem_limit_bytes=int(budget),
        ),
    )(Xp, Wmu, Wp_, EW, bmu, bp_, eb)

    # Remove the exact KL contribution of the host-side padding.
    n_pad_elems = (K_pad * N_pad - K * N) + (N_pad - N)
    lqw = jnp.sum(lqw_parts) - n_pad_elems * _LQW_PAD_PER_ELEM
    lpw = jnp.sum(lpw_parts) - n_pad_elems * _LPW_PAD_PER_ELEM
    return out[:M, :N], lqw, lpw


def matmul_bias(X, W, b):
    """Deterministic forward: X @ W + b via the bf16 MXU kernel."""
    M, K = X.shape
    Kw, N = W.shape
    assert K == Kw
    K_pad = _round_up(K, 128)
    N_pad = _round_up(N, 128)

    budget = _vmem_budget()
    tm, tk, tn = _choose_tiles(M, K_pad, N_pad, budget, n_w_arrays=1, w_bytes=2)
    M_pad = _round_up(M, tm)
    grid = (M_pad // tm, N_pad // tn, K_pad // tk)

    Xp = _pad2(X, M_pad, K_pad).astype(jnp.bfloat16)
    Wp = _pad2(W, K_pad, N_pad).astype(jnp.bfloat16)
    bp = _pad2(b.reshape(1, N), 1, N_pad)

    out = pl.pallas_call(
        _matmul_bias_kernel,
        out_shape=jax.ShapeDtypeStruct((M_pad, N_pad), jnp.float32),
        grid_spec=pltpu.PrefetchScalarGridSpec(
            num_scalar_prefetch=0,
            grid=grid,
            in_specs=[
                pl.BlockSpec((tm, tk), lambda i, j, k: (i, k)),
                pl.BlockSpec((tk, tn), lambda i, j, k: (k, j)),
                pl.BlockSpec((1, tn), lambda i, j, k: (0, j)),
            ],
            out_specs=pl.BlockSpec((tm, tn), lambda i, j, k: (i, j)),
            scratch_shapes=[pltpu.VMEM((tm, tn), jnp.float32)],
        ),
        compiler_params=pltpu.CompilerParams(
            dimension_semantics=("parallel", "parallel", "arbitrary"),
            vmem_limit_bytes=int(budget),
        ),
    )(Xp, Wp, bp)
    return out[:M, :N]


def bayes_linear_forward(X, W_mu, W_p, b_mu, b_p, eps_W, eps_b, *, sample=True):
    """Forward pass of BayesLinear_Normalq.  Returns (out, lqw, lpw)."""
    if not sample:
        out = matmul_bias(X, W_mu, b_mu)
        zero = jnp.zeros((), jnp.float32)
        return out, zero, zero
    return _bayes_linear_sampled(X, W_mu, W_p, b_mu, b_p, eps_W, eps_b)


# ------------------------------ References --------------------------------- #

def _gauss_loglike_sum(x, mu, sigma):
    cte = -0.5 * LOG_2PI
    return jnp.sum(cte - jnp.log(sigma) - 0.5 * ((x - mu) / sigma) ** 2)


def bayes_linear_reference(X, W_mu, W_p, b_mu, b_p, eps_W, eps_b):
    """Pure f32 reference matching the torch module."""
    std_w = 1e-6 + jax.nn.softplus(W_p)
    std_b = 1e-6 + jax.nn.softplus(b_p)
    W = W_mu + std_w * eps_W
    b = b_mu + std_b * eps_b
    out = jnp.dot(X, W, precision=jax.lax.Precision.HIGHEST) + b[None, :]
    lqw = _gauss_loglike_sum(W, W_mu, std_w) + _gauss_loglike_sum(b, b_mu, std_b)
    lpw = (_gauss_loglike_sum(W, PRIOR_MU, PRIOR_SIGMA)
           + _gauss_loglike_sum(b, PRIOR_MU, PRIOR_SIGMA))
    return out, lqw, lpw


def _bf16_matmul_ref(X, W, b):
    """bf16-faithful reference: bf16-rounded operands, f32 accumulation."""
    Xb = X.astype(jnp.bfloat16).astype(jnp.float32)
    Wb = W.astype(jnp.bfloat16).astype(jnp.float32)
    return jnp.dot(Xb, Wb, precision=jax.lax.Precision.HIGHEST) + b[None, :]


# --------------------------------- Main ------------------------------------ #

if __name__ == "__main__":
    def run_case(batch, n_in, n_out, seed):
        key = jax.random.PRNGKey(seed)
        ks = jax.random.split(key, 7)

        # Parameter init mirroring the torch __init__ ranges.
        W_mu = jax.random.uniform(ks[0], (n_in, n_out), jnp.float32, -0.1, 0.1)
        W_p = jax.random.uniform(ks[1], (n_in, n_out), jnp.float32, -3.0, -2.0)
        b_mu = jax.random.uniform(ks[2], (n_out,), jnp.float32, -0.1, 0.1)
        b_p = jax.random.uniform(ks[3], (n_out,), jnp.float32, -3.0, -2.0)
        X = jax.random.normal(ks[4], (batch, n_in), jnp.float32)
        eps_W = jax.random.normal(ks[5], (n_in, n_out), jnp.float32)
        eps_b = jax.random.normal(ks[6], (n_out,), jnp.float32)

        # Sampled (training) forward through the fused Pallas kernel.
        out, lqw, lpw = bayes_linear_forward(
            X, W_mu, W_p, b_mu, b_p, eps_W, eps_b, sample=True)
        jax.block_until_ready((out, lqw, lpw))

        # Deterministic (eval) forward through the matmul kernel.
        out_det, _, _ = bayes_linear_forward(
            X, W_mu, W_p, b_mu, b_p, eps_W, eps_b, sample=False)
        jax.block_until_ready(out_det)

        # References.
        ref_out, ref_lqw, ref_lpw = bayes_linear_reference(
            X, W_mu, W_p, b_mu, b_p, eps_W, eps_b)
        std_w = 1e-6 + _softplus(W_p)
        std_b = 1e-6 + _softplus(b_p)
        W_s = W_mu + std_w * eps_W
        b_s = b_mu + std_b * eps_b
        ref_out_bf16 = _bf16_matmul_ref(X, W_s, b_s)
        ref_det_bf16 = _bf16_matmul_ref(X, W_mu, b_mu)

        # Tight check against the bf16-faithful matmul reference.
        np.testing.assert_allclose(np.asarray(out), np.asarray(ref_out_bf16),
                                   rtol=2e-3, atol=2e-3)
        # Loose sanity check against the full-f32 reference (bf16 MXU inputs).
        np.testing.assert_allclose(np.asarray(out), np.asarray(ref_out),
                                   rtol=0.05, atol=0.25)
        # KL terms are computed entirely in f32 -> tight tolerance.
        np.testing.assert_allclose(float(lqw), float(ref_lqw), rtol=2e-4, atol=1.0)
        np.testing.assert_allclose(float(lpw), float(ref_lpw), rtol=2e-4, atol=1.0)
        # Deterministic path.
        np.testing.assert_allclose(np.asarray(out_det), np.asarray(ref_det_bf16),
                                   rtol=2e-3, atol=2e-3)

    # Aligned dims; batch=20 exercises the M padding path.
    run_case(batch=20, n_in=256, n_out=128, seed=0)
    # Non-128-multiple n_in / n_out exercises K/N padding + analytic KL correction.
    run_case(batch=7, n_in=200, n_out=120, seed=1)

    print("KERNEL_OK")
</pallas_src>

<mosaic_0001>
module attributes {stable_mosaic.version = 11 : i64} {
  func.func @kernel(%arg0: i32, %arg1: i32, %arg2: i32, %arg3: memref<32x256xbf16, #tpu.memory_space<vmem>>, %arg4: memref<256x128xf32, #tpu.memory_space<vmem>>, %arg5: memref<256x128xf32, #tpu.memory_space<vmem>>, %arg6: memref<256x128xf32, #tpu.memory_space<vmem>>, %arg7: memref<1x128xf32, #tpu.memory_space<vmem>>, %arg8: memref<1x128xf32, #tpu.memory_space<vmem>>, %arg9: memref<1x128xf32, #tpu.memory_space<vmem>>, %arg10: memref<32x128xf32, #tpu.memory_space<vmem>>, %arg11: memref<2xf32, #tpu.memory_space<smem>>, %arg12: memref<2xf32, #tpu.memory_space<smem>>, %arg13: memref<32x128xf32, #tpu.memory_space<vmem>>) attributes {dimension_semantics = [#tpu.dimension_semantics<arbitrary>, #tpu.dimension_semantics<arbitrary>, #tpu.dimension_semantics<arbitrary>], iteration_bounds = array<i64: 1, 1, 1>, scalar_prefetch = 0 : i64, scratch_operands = 1 : i64, tpu.core_type = #tpu.core_type<tc>, window_params = [{transform_indices = @transform_0, window_bounds = array<i64: 32, 256>}, {transform_indices = @transform_1, window_bounds = array<i64: 256, 128>}, {transform_indices = @transform_2, window_bounds = array<i64: 256, 128>}, {transform_indices = @transform_3, window_bounds = array<i64: 256, 128>}, {transform_indices = @transform_4, window_bounds = array<i64: 1, 128>}, {transform_indices = @transform_5, window_bounds = array<i64: 1, 128>}, {transform_indices = @transform_6, window_bounds = array<i64: 1, 128>}, {transform_indices = @transform_7, window_bounds = array<i64: 32, 128>}, {transform_indices = @transform_8, window_bounds = array<i64: 2>}, {transform_indices = @transform_9, window_bounds = array<i64: 2>}]} {
    %c0 = arith.constant 0 : index
    %c0_0 = arith.constant 0 : index
    %0 = vector.load %arg5[%c0, %c0_0] : memref<256x128xf32, #tpu.memory_space<vmem>>, vector<256x128xf32>
    %cst = arith.constant 2.000000e+01 : f32
    %1 = vector.broadcast %cst : f32 to vector<256x128xf32>
    %2 = arith.cmpf ogt, %0, %1 : vector<256x128xf32>
    %cst_1 = arith.constant 2.000000e+01 : f32
    %3 = vector.broadcast %cst_1 : f32 to vector<256x128xf32>
    %4 = arith.minimumf %0, %3 : vector<256x128xf32>
    %5 = math.exp %4 : vector<256x128xf32>
    %cst_2 = arith.constant 1.000000e+00 : f32
    %6 = vector.broadcast %cst_2 : f32 to vector<256x128xf32>
    %7 = arith.addf %6, %5 : vector<256x128xf32>
    %8 = math.log %7 : vector<256x128xf32>
    %9 = arith.select %2, %0, %8 : vector<256x128xi1>, vector<256x128xf32>
    %cst_3 = arith.constant 9.99999997E-7 : f32
    %10 = vector.broadcast %cst_3 : f32 to vector<256x128xf32>
    %11 = arith.addf %10, %9 : vector<256x128xf32>
    %c0_4 = arith.constant 0 : index
    %c0_5 = arith.constant 0 : index
    %12 = vector.load %arg6[%c0_4, %c0_5] : memref<256x128xf32, #tpu.memory_space<vmem>>, vector<256x128xf32>
    %c0_6 = arith.constant 0 : index
    %c0_7 = arith.constant 0 : index
    %13 = vector.load %arg4[%c0_6, %c0_7] : memref<256x128xf32, #tpu.memory_space<vmem>>, vector<256x128xf32>
    %14 = arith.mulf %11, %12 : vector<256x128xf32>
    %15 = arith.addf %13, %14 : vector<256x128xf32>
    %c0_i32 = arith.constant 0 : i32
    %16 = arith.cmpi eq, %arg2, %c0_i32 : i32
    %17 = arith.extui %16 : i1 to i32
    %c0_i32_8 = arith.constant 0 : i32
    %18 = arith.cmpi ne, %17, %c0_i32_8 : i32
    scf.if %18 {
      %cst_23 = arith.constant 0.000000e+00 : f32
      %36 = vector.broadcast %cst_23 : f32 to vector<32x128xf32>
      %c0_24 = arith.constant 0 : index
      %c0_25 = arith.constant 0 : index
      %37 = vector.load %arg13[%c0_24, %c0_25] : memref<32x128xf32, #tpu.memory_space<vmem>>, vector<32x128xf32>
      tpu.vector_store %arg13[%c0_24, %c0_25], %36 {strides = array<i32>} : memref<32x128xf32, #tpu.memory_space<vmem>>, vector<32x128xf32>,
    } else {
    }
    %c0_9 = arith.constant 0 : index
    %c0_10 = arith.constant 0 : index
    %19 = vector.load %arg13[%c0_9, %c0_10] : memref<32x128xf32, #tpu.memory_space<vmem>>, vector<32x128xf32>
    %c0_11 = arith.constant 0 : index
    %c0_12 = arith.constant 0 : index
    %20 = vector.load %arg3[%c0_11, %c0_12] : memref<32x256xbf16, #tpu.memory_space<vmem>>, vector<32x256xbf16>
    %21 = arith.truncf %15 : vector<256x128xf32> to vector<256x128xbf16>
    %cst_13 = arith.constant dense<0.000000e+00> : vector<32x128xf32>
    %22 = tpu.matmul %20, %21, %cst_13 {dimension_numbers = #tpu.dot_dimension_numbers<[1], [0], [0], [1], [0, 0, 1, 1], [], []>} : vector<32x256xbf16>, vector<256x128xbf16>, vector<32x128xf32> -> vector<32x128xf32>
    %23 = arith.addf %19, %22 : vector<32x128xf32>
    %c0_14 = arith.constant 0 : index
    %c0_15 = arith.constant 0 : index
    %24 = vector.load %arg13[%c0_14, %c0_15] : memref<32x128xf32, #tpu.memory_space<vmem>>, vector<32x128xf32>
    tpu.vector_store %arg13[%c0_14, %c0_15], %23 {strides = array<i32>} : memref<32x128xf32, #tpu.memory_space<vmem>>, vector<32x128xf32>,
    %c0_i32_16 = arith.constant 0 : i32
    %25 = arith.cmpi eq, %arg0, %c0_i32_16 : i32
    %26 = arith.extui %25 : i1 to i32
    %c0_i32_17 = arith.constant 0 : i32
    %27 = arith.cmpi ne, %26, %c0_i32_17 : i32
    scf.if %27 {
      %36 = math.log %11 : vector<256x128xf32>
      %37 = vector.shape_cast %36 : vector<256x128xf32> to vector<1x256x128xf32>
      %cst_23 = arith.constant dense<0.000000e+00> : vector<1xf32>
      %38 = vector.multi_reduction <add>, %37, %cst_23 [1, 2] : vector<1x256x128xf32> to vector<1xf32>
      %39 = vector.shape_cast %38 : vector<1xf32> to vector<1x1x1xf32>
      %40 = vector.extract %39[0, 0, 0] : f32 from vector<1x1x1xf32>
      %cst_24 = arith.constant -30111.7773 : f32
      %41 = arith.subf %cst_24, %40 : f32
      %42 = arith.mulf %12, %12 : vector<256x128xf32>
      %43 = vector.shape_cast %42 : vector<256x128xf32> to vector<1x256x128xf32>
      %cst_25 = arith.constant dense<0.000000e+00> : vector<1xf32>
      %44 = vector.multi_reduction <add>, %43, %cst_25 [1, 2] : vector<1x256x128xf32> to vector<1xf32>
      %45 = vector.shape_cast %44 : vector<1xf32> to vector<1x1x1xf32>
      %46 = vector.extract %45[0, 0, 0] : f32 from vector<1x1x1xf32>
      %cst_26 = arith.constant 5.000000e-01 : f32
      %47 = arith.mulf %cst_26, %46 : f32
      %48 = arith.subf %41, %47 : f32
      %c1_i32 = arith.constant 1 : i32
      %49 = arith.muli %arg1, %c1_i32 : i32
      %50 = arith.addi %49, %arg2 : i32
      %51 = arith.index_cast %50 : i32 to index
      %52 = memref.load %arg11[%51] : memref<2xf32, #tpu.memory_space<smem>>
      memref.store %48, %arg11[%51] : memref<2xf32, #tpu.memory_space<smem>>
      %53 = arith.mulf %15, %15 : vector<256x128xf32>
      %54 = vector.shape_cast %53 : vector<256x128xf32> to vector<1x256x128xf32>
      %cst_27 = arith.constant dense<0.000000e+00> : vector<1xf32>
      %55 = vector.multi_reduction <add>, %54, %cst_27 [1, 2] : vector<1x256x128xf32> to vector<1xf32>
      %56 = vector.shape_cast %55 : vector<1xf32> to vector<1x1x1xf32>
      %57 = vector.extract %56[0, 0, 0] : f32 from vector<1x1x1xf32>
      %cst_28 = arith.constant 5.000000e+01 : f32
      %58 = arith.mulf %cst_28, %57 : f32
      %cst_29 = arith.constant 45339.332 : f32
      %59 = arith.subf %cst_29, %58 : f32
      %c1_i32_30 = arith.constant 1 : i32
      %60 = arith.muli %arg1, %c1_i32_30 : i32
      %61 = arith.addi %60, %arg2 : i32
      %62 = arith.index_cast %61 : i32 to index
      %63 = memref.load %arg12[%62] : memref<2xf32, #tpu.memory_space<smem>>
      memref.store %59, %arg12[%62] : memref<2xf32, #tpu.memory_space<smem>>
    } else {
    }
    %c0_i32_18 = arith.constant 0 : i32
    %28 = arith.cmpi eq, %arg0, %c0_i32_18 : i32
    %c0_i32_19 = arith.constant 0 : i32
    %29 = arith.cmpi eq, %arg2, %c0_i32_19 : i32
    %30 = arith.andi %28, %29 : i1
    %31 = arith.extui %30 : i1 to i32
    %c0_i32_20 = arith.constant 0 : i32
    %32 = arith.cmpi ne, %31, %c0_i32_20 : i32
    scf.if %32 {
      %c0_23 = arith.constant 0 : index
      %c0_24 = arith.constant 0 : index
      %36 = vector.load %arg8[%c0_23, %c0_24] : memref<1x128xf32, #tpu.memory_space<vmem>>, vector<1x128xf32>
      %cst_25 = arith.constant 2.000000e+01 : f32
      %37 = vector.broadcast %cst_25 : f32 to vector<1x128xf32>
      %38 = arith.cmpf ogt, %36, %37 : vector<1x128xf32>
      %cst_26 = arith.constant 2.000000e+01 : f32
      %39 = vector.broadcast %cst_26 : f32 to vector<1x128xf32>
      %40 = arith.minimumf %36, %39 : vector<1x128xf32>
      %41 = math.exp %40 : vector<1x128xf32>
      %cst_27 = arith.constant 1.000000e+00 : f32
      %42 = vector.broadcast %cst_27 : f32 to vector<1x128xf32>
      %43 = arith.addf %42, %41 : vector<1x128xf32>
      %44 = math.log %43 : vector<1x128xf32>
      %45 = arith.select %38, %36, %44 : vector<1x128xi1>, vector<1x128xf32>
      %cst_28 = arith.constant 9.99999997E-7 : f32
      %46 = vector.broadcast %cst_28 : f32 to vector<1x128xf32>
      %47 = arith.addf %46, %45 : vector<1x128xf32>
      %c0_29 = arith.constant 0 : index
      %c0_30 = arith.constant 0 : index
      %48 = vector.load %arg9[%c0_29, %c0_30] : memref<1x128xf32, #tpu.memory_space<vmem>>, vector<1x128xf32>
      %c0_31 = arith.constant 0 : index
      %c0_32 = arith.constant 0 : index
      %49 = vector.load %arg7[%c0_31, %c0_32] : memref<1x128xf32, #tpu.memory_space<vmem>>, vector<1x128xf32>
      %50 = arith.mulf %47, %48 : vector<1x128xf32>
      %51 = arith.addf %49, %50 : vector<1x128xf32>
      %c1_i32 = arith.constant 1 : i32
      %52 = arith.addi %c1_i32, %arg1 : i32
      %53 = math.log %47 : vector<1x128xf32>
      %54 = vector.shape_cast %53 : vector<1x128xf32> to vector<1x1x128xf32>
      %cst_33 = arith.constant dense<0.000000e+00> : vector<1xf32>
      %55 = vector.multi_reduction <add>, %54, %cst_33 [1, 2] : vector<1x1x128xf32> to vector<1xf32>
      %56 = vector.shape_cast %55 : vector<1xf32> to vector<1x1x1xf32>
      %57 = vector.extract %56[0, 0, 0] : f32 from vector<1x1x1xf32>
      %cst_34 = arith.constant -117.62413 : f32
      %58 = arith.subf %cst_34, %57 : f32
      %59 = arith.mulf %48, %48 : vector<1x128xf32>
      %60 = vector.shape_cast %59 : vector<1x128xf32> to vector<1x1x128xf32>
      %cst_35 = arith.constant dense<0.000000e+00> : vector<1xf32>
      %61 = vector.multi_reduction <add>, %60, %cst_35 [1, 2] : vector<1x1x128xf32> to vector<1xf32>
      %62 = vector.shape_cast %61 : vector<1xf32> to vector<1x1x1xf32>
      %63 = vector.extract %62[0, 0, 0] : f32 from vector<1x1x1xf32>
      %cst_36 = arith.constant 5.000000e-01 : f32
      %64 = arith.mulf %cst_36, %63 : f32
      %65 = arith.subf %58, %64 : f32
      %66 = arith.index_cast %52 : i32 to index
      %67 = memref.load %arg11[%66] : memref<2xf32, #tpu.memory_space<smem>>
      memref.store %65, %arg11[%66] : memref<2xf32, #tpu.memory_space<smem>>
      %68 = arith.mulf %51, %51 : vector<1x128xf32>
      %69 = vector.shape_cast %68 : vector<1x128xf32> to vector<1x1x128xf32>
      %cst_37 = arith.constant dense<0.000000e+00> : vector<1xf32>
      %70 = vector.multi_reduction <add>, %69, %cst_37 [1, 2] : vector<1x1x128xf32> to vector<1xf32>
      %71 = vector.shape_cast %70 : vector<1xf32> to vector<1x1x1xf32>
      %72 = vector.extract %71[0, 0, 0] : f32 from vector<1x1x1xf32>
      %cst_38 = arith.constant 5.000000e+01 : f32
      %73 = arith.mulf %cst_38, %72 : f32
      %cst_39 = arith.constant 177.106766 : f32
      %74 = arith.subf %cst_39, %73 : f32
      %75 = arith.index_cast %52 : i32 to index
      %76 = memref.load %arg12[%75] : memref<2xf32, #tpu.memory_space<smem>>
      memref.store %74, %arg12[%75] : memref<2xf32, #tpu.memory_space<smem>>
    } else {
    }
    %c0_i32_21 = arith.constant 0 : i32
    %33 = arith.cmpi eq, %arg2, %c0_i32_21 : i32
    %34 = arith.extui %33 : i1 to i32
    %c0_i32_22 = arith.constant 0 : i32
    %35 = arith.cmpi ne, %34, %c0_i32_22 : i32
    scf.if %35 {
      %c0_23 = arith.constant 0 : index
      %c0_24 = arith.constant 0 : index
      %36 = vector.load %arg8[%c0_23, %c0_24] : memref<1x128xf32, #tpu.memory_space<vmem>>, vector<1x128xf32>
      %cst_25 = arith.constant 2.000000e+01 : f32
      %37 = vector.broadcast %cst_25 : f32 to vector<1x128xf32>
      %38 = arith.cmpf ogt, %36, %37 : vector<1x128xf32>
      %cst_26 = arith.constant 2.000000e+01 : f32
      %39 = vector.broadcast %cst_26 : f32 to vector<1x128xf32>
      %40 = arith.minimumf %36, %39 : vector<1x128xf32>
      %41 = math.exp %40 : vector<1x128xf32>
      %cst_27 = arith.constant 1.000000e+00 : f32
      %42 = vector.broadcast %cst_27 : f32 to vector<1x128xf32>
      %43 = arith.addf %42, %41 : vector<1x128xf32>
      %44 = math.log %43 : vector<1x128xf32>
      %45 = arith.select %38, %36, %44 : vector<1x128xi1>, vector<1x128xf32>
      %cst_28 = arith.constant 9.99999997E-7 : f32
      %46 = vector.broadcast %cst_28 : f32 to vector<1x128xf32>
      %47 = arith.addf %46, %45 : vector<1x128xf32>
      %c0_29 = arith.constant 0 : index
      %c0_30 = arith.constant 0 : index
      %48 = vector.load %arg7[%c0_29, %c0_30] : memref<1x128xf32, #tpu.memory_space<vmem>>, vector<1x128xf32>
      %c0_31 = arith.constant 0 : index
      %c0_32 = arith.constant 0 : index
      %49 = vector.load %arg9[%c0_31, %c0_32] : memref<1x128xf32, #tpu.memory_space<vmem>>, vector<1x128xf32>
      %50 = arith.mulf %47, %49 : vector<1x128xf32>
      %51 = arith.addf %48, %50 : vector<1x128xf32>
      %c0_33 = arith.constant 0 : index
      %c0_34 = arith.constant 0 : index
      %52 = vector.load %arg13[%c0_33, %c0_34] : memref<32x128xf32, #tpu.memory_space<vmem>>, vector<32x128xf32>
      %53 = vector.broadcast %51 : vector<1x128xf32> to vector<32x128xf32>
      %54 = arith.addf %52, %53 : vector<32x128xf32>
      %c0_35 = arith.constant 0 : index
      %c0_36 = arith.constant 0 : index
      %55 = vector.load %arg10[%c0_35, %c0_36] : memref<32x128xf32, #tpu.memory_space<vmem>>, vector<32x128xf32>
      tpu.vector_store %arg10[%c0_35, %c0_36], %54 {strides = array<i32>} : memref<32x128xf32, #tpu.memory_space<vmem>>, vector<32x128xf32>,
    } else {
    }
    return
  }
  func.func @transform_0(%arg0: i32, %arg1: i32, %arg2: i32) -> (i32, i32) {
    %c0_i32 = arith.constant 0 : i32
    return %arg0, %arg2 : i32, i32
  }
  func.func @transform_1(%arg0: i32, %arg1: i32, %arg2: i32) -> (i32, i32) {
    %c0_i32 = arith.constant 0 : i32
    return %arg2, %arg1 : i32, i32
  }
  func.func @transform_2(%arg0: i32, %arg1: i32, %arg2: i32) -> (i32, i32) {
    %c0_i32 = arith.constant 0 : i32
    return %arg2, %arg1 : i32, i32
  }
  func.func @transform_3(%arg0: i32, %arg1: i32, %arg2: i32) -> (i32, i32) {
    %c0_i32 = arith.constant 0 : i32
    return %arg2, %arg1 : i32, i32
  }
  func.func @transform_4(%arg0: i32, %arg1: i32, %arg2: i32) -> (i32, i32) {
    %c0_i32 = arith.constant 0 : i32
    %c0_i32_0 = arith.constant 0 : i32
    return %c0_i32, %arg1 : i32, i32
  }
  func.func @transform_5(%arg0: i32, %arg1: i32, %arg2: i32) -> (i32, i32) {
    %c0_i32 = arith.constant 0 : i32
    %c0_i32_0 = arith.constant 0 : i32
    return %c0_i32, %arg1 : i32, i32
  }
  func.func @transform_6(%arg0: i32, %arg1: i32, %arg2: i32) -> (i32, i32) {
    %c0_i32 = arith.constant 0 : i32
    %c0_i32_0 = arith.constant 0 : i32
    return %c0_i32, %arg1 : i32, i32
  }
  func.func @transform_7(%arg0: i32, %arg1: i32, %arg2: i32) -> (i32, i32) {
    %c0_i32 = arith.constant 0 : i32
    return %arg0, %arg1 : i32, i32
  }
  func.func @transform_8(%arg0: i32, %arg1: i32, %arg2: i32) -> i32 {
    %c0_i32 = arith.constant 0 : i32
    %c0_i32_0 = arith.constant 0 : i32
    return %c0_i32 : i32
  }
  func.func @transform_9(%arg0: i32, %arg1: i32, %arg2: i32) -> i32 {
    %c0_i32 = arith.constant 0 : i32
    %c0_i32_0 = arith.constant 0 : i32
    return %c0_i32 : i32
  }
}

</mosaic_0001>

<llo_original>
// kernel: tpu_custom_call.1
$region0: #{tpu_custom_call.1}
  #allocation0 [shape = 'u32[]', space=smem, size = 0x4, offset = 0x4, fixed_abs, tag = 'smem constant byte address 0x4 - core index']
  #allocation1 [shape = 'u32[144,128]{1,0:T(1,128)}', space=vmem, size = 0x12000, scoped, tag = 'internal scratch']
  #allocation2 [shape = 'f32[32,128]{1,0:T(8,128)}', space=vmem, size = 0x4000, scoped, tag = 'scratch operand']
  %s0 = inlined_call_operand.hbm [shape: bf16[32,256], index: 0, kind: input, shape index: {}]
  %s1 = inlined_call_operand.hbm [shape: f32[256,128], index: 1, kind: input, shape index: {}]
  %s2 = inlined_call_operand.hbm [shape: f32[256,128], index: 2, kind: input, shape index: {}]
  %s3 = inlined_call_operand.hbm [shape: f32[256,128], index: 3, kind: input, shape index: {}]
  %s4 = inlined_call_operand.vmem [shape: f32[1,128], index: 4, kind: input, shape index: {}]
  %s5 = inlined_call_operand.vmem [shape: f32[1,128], index: 5, kind: input, shape index: {}]
  %s6 = inlined_call_operand.vmem [shape: f32[1,128], index: 6, kind: input, shape index: {}]
  %s7 = inlined_call_operand.hbm [shape: f32[32,128], index: 7, kind: output, shape index: {0}]
  %s8 = inlined_call_operand.hbm [shape: f32[2], index: 8, kind: output, shape index: {1}]
  %s9 = inlined_call_operand.hbm [shape: f32[2], index: 9, kind: output, shape index: {2}]
  %10 = xla_tuple %s7, %s8, %s9
  %s11 = sld [smem:[#allocation0]]
  $region86: #{tpu_custom_call.1} parent=0
    _
  %s13 = ssub.s32 1, %s11
  %s14 = scalar_select 0, %s13, %s11
  $region1: #{tpu_custom_call.1} parent=0
    #allocation3 [shape = 'u8[16384]{0}', space=vmem, size = 0x4000, scoped, tag = 'input window, operand 0, single buffered']
    #allocation4 [shape = 's32[1]{0}', space=sflag, size = 0x4, scoped, tag = 'scoped memory for tpu_custom_call.1']
    #allocation5 [shape = 's32[1]{0}', space=sflag, size = 0x4, scoped, tag = 'scoped memory for tpu_custom_call.1']
    #allocation6 [shape = 's32[1]{0}', space=sflag, size = 0x4, scoped, tag = 'scoped memory for tpu_custom_call.1']
    #allocation7 [shape = 'u8[131072]{0}', space=vmem, size = 0x20000, scoped, tag = 'input window, operand 1, single buffered']
    #allocation8 [shape = 's32[1]{0}', space=sflag, size = 0x4, scoped, tag = 'scoped memory for tpu_custom_call.1']
    #allocation9 [shape = 'u8[131072]{0}', space=vmem, size = 0x20000, scoped, tag = 'input window, operand 2, single buffered']
    #allocation10 [shape = 'u8[131072]{0}', space=vmem, size = 0x20000, scoped, tag = 'input window, operand 3, single buffered']
    #allocation11 [shape = 's32[1]{0}', space=sflag, size = 0x4, scoped, tag = 'scoped memory for tpu_custom_call.1']
    #allocation12 [shape = 'u8[16384]{0}', space=vmem, size = 0x4000, scoped, tag = 'output window, operand 0, single buffered']
    #allocation13 [shape = 'u8[512]{0}', space=smem, size = 0x200, scoped, tag = 'output window, operand 1, single buffered']
    #allocation14 [shape = 'u8[512]{0}', space=smem, size = 0x200, scoped, tag = 'output window, operand 2, single buffered']
    #allocation15 [shape = 's32[1]{0}', space=sflag, size = 0x4, scoped, tag = 'scoped memory for tpu_custom_call.1']
    %15 = vsyncpa [#allocation4], 0
    %16 = vsyncpa [#allocation8], 0
    %17 = vsyncpa [#allocation11], 0
    %18 = vsyncpa [#allocation5], 0
    %19 = vsyncpa [#allocation6], 0
    %20 = vsyncpa [#allocation15], 0
    // Predicated region
    $region2: #{tpu_custom_call.1} parent=1 // pred_check
      _
    $region3: #{tpu_custom_call.1} parent=1 // pred_check_branch
      %22 = sbr.rel (0) target = $region5
    $region4: #{tpu_custom_call.1} parent=1 // pred_region
      %s24 = ssub.s32 512, 512
      %25 = vsyncadd [#allocation4], %s24
      %s26 = sshll.u32 [#allocation3], 4
      %s27 = int_to_ptr.vmem [resolvable:$true] %s26
      %32 = dma.hbm_to_vmem [thread:$0]  %s0, 512, %s27, [#allocation4], 128, 128, 8
    $region5: #{tpu_custom_call.1} parent=1 // pred_fallthru
      _
    // Predicated region
    $region6: #{tpu_custom_call.1} parent=1 // pred_check
      _
    $region7: #{tpu_custom_call.1} parent=1 // pred_check_branch
      %34 = sbr.rel (0) target = $region9
    $region8: #{tpu_custom_call.1} parent=1 // pred_region
      %s36 = ssub.s32 4096, 4096
      %37 = vsyncadd [#allocation8], %s36
      %s38 = sshll.u32 [#allocation7], 4
      %s39 = int_to_ptr.vmem [resolvable:$true] %s38
      %44 = dma.hbm_to_vmem [thread:$0]  %s1, 4096, %s39, [#allocation8], 128, 128, 8
    $region9: #{tpu_custom_call.1} parent=1 // pred_fallthru
      _
    // Predicated region
    $region10: #{tpu_custom_call.1} parent=1 // pred_check
      _
    $region11: #{tpu_custom_call.1} parent=1 // pred_check_branch
      %46 = sbr.rel (0) target = $region13
    $region12: #{tpu_custom_call.1} parent=1 // pred_region
      %s48 = ssub.s32 4096, 4096
      %49 = vsyncadd [#allocation8], %s48
      %s50 = sshll.u32 [#allocation9], 4
      %s51 = int_to_ptr.vmem [resolvable:$true] %s50
      %56 = dma.hbm_to_vmem [thread:$0]  %s2, 4096, %s51, [#allocation8], 128, 128, 8
    $region13: #{tpu_custom_call.1} parent=1 // pred_fallthru
      _
    // Predicated region
    $region14: #{tpu_custom_call.1} parent=1 // pred_check
      _
    $region15: #{tpu_custom_call.1} parent=1 // pred_check_branch
      %58 = sbr.rel (0) target = $region17
    $region16: #{tpu_custom_call.1} parent=1 // pred_region
      %s60 = ssub.s32 4096, 4096
      %61 = vsyncadd [#allocation11], %s60
      %s62 = sshll.u32 [#allocation10], 4
      %s63 = int_to_ptr.vmem [resolvable:$true] %s62
      %68 = dma.hbm_to_vmem [thread:$0]  %s3, 4096, %s63, [#allocation11], 128, 128, 8
    $region17: #{tpu_custom_call.1} parent=1 // pred_fallthru
      _
    // Predicated region
    $region18: #{tpu_custom_call.1} parent=1 // pred_check
      _
    $region19: #{tpu_custom_call.1} parent=1 // pred_check_branch
      %70 = sbr.rel (0) target = $region21
    $region20: #{tpu_custom_call.1} parent=1 // pred_region
      _
    $region21: #{tpu_custom_call.1} parent=1 // pred_fallthru
      _
    // Predicated region
    $region22: #{tpu_custom_call.1} parent=1 // pred_check
      _
    $region23: #{tpu_custom_call.1} parent=1 // pred_check_branch
      %72 = sbr.rel (0) target = $region25
    $region24: #{tpu_custom_call.1} parent=1 // pred_region
      _
    $region25: #{tpu_custom_call.1} parent=1 // pred_fallthru
      _
    // Predicated region
    $region26: #{tpu_custom_call.1} parent=1 // pred_check
      _
    $region27: #{tpu_custom_call.1} parent=1 // pred_check_branch
      %74 = sbr.rel (0) target = $region29
    $region28: #{tpu_custom_call.1} parent=1 // pred_region
      _
    $region29: #{tpu_custom_call.1} parent=1 // pred_fallthru
      _
    // Predicated region
    $region30: #{tpu_custom_call.1} parent=1 // pred_check
      _
    $region31: #{tpu_custom_call.1} parent=1 // pred_check_branch
      %76 = sbr.rel (0) target = $region33
    $region32: #{tpu_custom_call.1} parent=1 // pred_region
      %77 = dma.done [#allocation4], 512
    $region33: #{tpu_custom_call.1} parent=1 // pred_fallthru
      _
    // Predicated region
    $region34: #{tpu_custom_call.1} parent=1 // pred_check
      _
    $region35: #{tpu_custom_call.1} parent=1 // pred_check_branch
      %79 = sbr.rel (0) target = $region37
    $region36: #{tpu_custom_call.1} parent=1 // pred_region
      %80 = dma.done [#allocation8], 4096
    $region37: #{tpu_custom_call.1} parent=1 // pred_fallthru
      _
    // Predicated region
    $region38: #{tpu_custom_call.1} parent=1 // pred_check
      _
    $region39: #{tpu_custom_call.1} parent=1 // pred_check_branch
      %82 = sbr.rel (0) target = $region41
    $region40: #{tpu_custom_call.1} parent=1 // pred_region
      %83 = dma.done [#allocation8], 4096
    $region41: #{tpu_custom_call.1} parent=1 // pred_fallthru
      _
    // Predicated region
    $region42: #{tpu_custom_call.1} parent=1 // pred_check
      _
    $region43: #{tpu_custom_call.1} parent=1 // pred_check_branch
      %85 = sbr.rel (0) target = $region45
    $region44: #{tpu_custom_call.1} parent=1 // pred_region
      %86 = dma.done [#allocation11], 4096
    $region45: #{tpu_custom_call.1} parent=1 // pred_fallthru
      _
    %v88 = vld [vmem:[#allocation9] sm:$0xff]
    %v89 = vld [vmem:[#allocation9 + $0x8] sm:$0xff]
    %v90 = vld [vmem:[#allocation9 + $0x10] sm:$0xff]
    %v91 = vld [vmem:[#allocation9 + $0x18] sm:$0xff]
    %v92 = vld [vmem:[#allocation9 + $0x20] sm:$0xff]
    %v93 = vld [vmem:[#allocation9 + $0x28] sm:$0xff]
    %v94 = vld [vmem:[#allocation9 + $0x30] sm:$0xff]
    %v95 = vld [vmem:[#allocation9 + $0x38] sm:$0xff]
    %v96 = vld [vmem:[#allocation9 + $0x40] sm:$0xff]
    %v97 = vld [vmem:[#allocation9 + $0x48] sm:$0xff]
    %v98 = vld [vmem:[#allocation9 + $0x50] sm:$0xff]
    %v99 = vld [vmem:[#allocation9 + $0x58] sm:$0xff]
    %v100 = vld [vmem:[#allocation9 + $0x60] sm:$0xff]
    %v101 = vld [vmem:[#allocation9 + $0x68] sm:$0xff]
    %v102 = vld [vmem:[#allocation9 + $0x70] sm:$0xff]
    %v103 = vld [vmem:[#allocation9 + $0x78] sm:$0xff]
    %v104 = vld [vmem:[#allocation9 + $0x80] sm:$0xff]
    %v105 = vld [vmem:[#allocation9 + $0x88] sm:$0xff]
    %v106 = vld [vmem:[#allocation9 + $0x90] sm:$0xff]
    %v107 = vld [vmem:[#allocation9 + $0x98] sm:$0xff]
    %v108 = vld [vmem:[#allocation9 + $0xa0] sm:$0xff]
    %v109 = vld [vmem:[#allocation9 + $0xa8] sm:$0xff]
    %v110 = vld [vmem:[#allocation9 + $0xb0] sm:$0xff]
    %v111 = vld [vmem:[#allocation9 + $0xb8] sm:$0xff]
    %v112 = vld [vmem:[#allocation9 + $0xc0] sm:$0xff]
    %v113 = vld [vmem:[#allocation9 + $0xc8] sm:$0xff]
    %v114 = vld [vmem:[#allocation9 + $0xd0] sm:$0xff]
    %v115 = vld [vmem:[#allocation9 + $0xd8] sm:$0xff]
    %v116 = vld [vmem:[#allocation9 + $0xe0] sm:$0xff]
    %v117 = vld [vmem:[#allocation9 + $0xe8] sm:$0xff]
    %v118 = vld [vmem:[#allocation9 + $0xf0] sm:$0xff]
    %v119 = vld [vmem:[#allocation9 + $0xf8] sm:$0xff]
    %vm120 = vcmp.gt.f32.partialorder %v88, 20.0
    %vm121 = vcmp.gt.f32.partialorder %v89, 20.0
    %vm122 = vcmp.gt.f32.partialorder %v90, 20.0
    %vm123 = vcmp.gt.f32.partialorder %v91, 20.0
    %vm124 = vcmp.gt.f32.partialorder %v92, 20.0
    %vm125 = vcmp.gt.f32.partialorder %v93, 20.0
    %vm126 = vcmp.gt.f32.partialorder %v94, 20.0
    %vm127 = vcmp.gt.f32.partialorder %v95, 20.0
    %vm128 = vcmp.gt.f32.partialorder %v96, 20.0
    %vm129 = vcmp.gt.f32.partialorder %v97, 20.0
    %vm130 = vcmp.gt.f32.partialorder %v98, 20.0
    %vm131 = vcmp.gt.f32.partialorder %v99, 20.0
    %vm132 = vcmp.gt.f32.partialorder %v100, 20.0
    %vm133 = vcmp.gt.f32.partialorder %v101, 20.0
    %vm134 = vcmp.gt.f32.partialorder %v102, 20.0
    %vm135 = vcmp.gt.f32.partialorder %v103, 20.0
    %vm136 = vcmp.gt.f32.partialorder %v104, 20.0
    %vm137 = vcmp.gt.f32.partialorder %v105, 20.0
    %vm138 = vcmp.gt.f32.partialorder %v106, 20.0
    %vm139 = vcmp.gt.f32.partialorder %v107, 20.0
    %vm140 = vcmp.gt.f32.partialorder %v108, 20.0
    %vm141 = vcmp.gt.f32.partialorder %v109, 20.0
    %vm142 = vcmp.gt.f32.partialorder %v110, 20.0
    %vm143 = vcmp.gt.f32.partialorder %v111, 20.0
    %vm144 = vcmp.gt.f32.partialorder %v112, 20.0
    %vm145 = vcmp.gt.f32.partialorder %v113, 20.0
    %vm146 = vcmp.gt.f32.partialorder %v114, 20.0
    %vm147 = vcmp.gt.f32.partialorder %v115, 20.0
    %vm148 = vcmp.gt.f32.partialorder %v116, 20.0
    %vm149 = vcmp.gt.f32.partialorder %v117, 20.0
    %vm150 = vcmp.gt.f32.partialorder %v118, 20.0
    %vm151 = vcmp.gt.f32.partialorder %v119, 20.0
    %v152 = vmin.f32 %v88, 20.0
    %v153 = vmin.f32 %v89, 20.0
    %v154 = vmin.f32 %v90, 20.0
    %v155 = vmin.f32 %v91, 20.0
    %v156 = vmin.f32 %v92, 20.0
    %v157 = vmin.f32 %v93, 20.0
    %v158 = vmin.f32 %v94, 20.0
    %v159 = vmin.f32 %v95, 20.0
    %v160 = vmin.f32 %v96, 20.0
    %v161 = vmin.f32 %v97, 20.0
    %v162 = vmin.f32 %v98, 20.0
    %v163 = vmin.f32 %v99, 20.0
    %v164 = vmin.f32 %v100, 20.0
    %v165 = vmin.f32 %v101, 20.0
    %v166 = vmin.f32 %v102, 20.0
    %v167 = vmin.f32 %v103, 20.0
    %v168 = vmin.f32 %v104, 20.0
    %v169 = vmin.f32 %v105, 20.0
    %v170 = vmin.f32 %v106, 20.0
    %v171 = vmin.f32 %v107, 20.0
    %v172 = vmin.f32 %v108, 20.0
    %v173 = vmin.f32 %v109, 20.0
    %v174 = vmin.f32 %v110, 20.0
    %v175 = vmin.f32 %v111, 20.0
    %v176 = vmin.f32 %v112, 20.0
    %v177 = vmin.f32 %v113, 20.0
    %v178 = vmin.f32 %v114, 20.0
    %v179 = vmin.f32 %v115, 20.0
    %v180 = vmin.f32 %v116, 20.0
    %v181 = vmin.f32 %v117, 20.0
    %v182 = vmin.f32 %v118, 20.0
    %v183 = vmin.f32 %v119, 20.0
    %v184 = vmul.f32 %v152, 1.442695
    %v185 = vpow.pop %v184
    %v186 = vmul.f32 %v153, 1.442695
    %v187 = vpow.pop %v186
    %v188 = vmul.f32 %v154, 1.442695
    %v189 = vpow.pop %v188
    %v190 = vmul.f32 %v155, 1.442695
    %v191 = vpow.pop %v190
    %v192 = vmul.f32 %v156, 1.442695
    %v193 = vpow.pop %v192
    %v194 = vmul.f32 %v157, 1.442695
    %v195 = vpow.pop %v194
    %v196 = vmul.f32 %v158, 1.442695
    %v197 = vpow.pop %v196
    %v198 = vmul.f32 %v159, 1.442695
    %v199 = vpow.pop %v198
    %v200 = vmul.f32 %v160, 1.442695
    %v201 = vpow.pop %v200
    %v202 = vmul.f32 %v161, 1.442695
    %v203 = vpow.pop %v202
    %v204 = vmul.f32 %v162, 1.442695
    %v205 = vpow.pop %v204
    %v206 = vmul.f32 %v163, 1.442695
    %v207 = vpow.pop %v206
    %v208 = vmul.f32 %v164, 1.442695
    %v209 = vpow.pop %v208
    %v210 = vmul.f32 %v165, 1.442695
    %v211 = vpow.pop %v210
    %v212 = vmul.f32 %v166, 1.442695
    %v213 = vpow.pop %v212
    %v214 = vmul.f32 %v167, 1.442695
    %v215 = vpow.pop %v214
    %v216 = vmul.f32 %v168, 1.442695
    %v217 = vpow.pop %v216
    %v218 = vmul.f32 %v169, 1.442695
    %v219 = vpow.pop %v218
    %v220 = vmul.f32 %v170, 1.442695
    %v221 = vpow.pop %v220
    %v222 = vmul.f32 %v171, 1.442695
    %v223 = vpow.pop %v222
    %v224 = vmul.f32 %v172, 1.442695
    %v225 = vpow.pop %v224
    %v226 = vmul.f32 %v173, 1.442695
    %v227 = vpow.pop %v226
    %v228 = vmul.f32 %v174, 1.442695
    %v229 = vpow.pop %v228
    %v230 = vmul.f32 %v175, 1.442695
    %v231 = vpow.pop %v230
    %v232 = vmul.f32 %v176, 1.442695
    %v233 = vpow.pop %v232
    %v234 = vmul.f32 %v177, 1.442695
    %v235 = vpow.pop %v234
    %v236 = vmul.f32 %v178, 1.442695
    %v237 = vpow.pop %v236
    %v238 = vmul.f32 %v179, 1.442695
    %v239 = vpow.pop %v238
    %v240 = vmul.f32 %v180, 1.442695
    %v241 = vpow.pop %v240
    %v242 = vmul.f32 %v181, 1.442695
    %v243 = vpow.pop %v242
    %v244 = vmul.f32 %v182, 1.442695
    %v245 = vpow.pop %v244
    %v246 = vmul.f32 %v183, 1.442695
    %v247 = vpow.pop %v246
    %v248 = vadd.f32 %v185, 1.0
    %v249 = vadd.f32 %v187, 1.0
    %v250 = vadd.f32 %v189, 1.0
    %v251 = vadd.f32 %v191, 1.0
    %v252 = vadd.f32 %v193, 1.0
    %v253 = vadd.f32 %v195, 1.0
    %v254 = vadd.f32 %v197, 1.0
    %v255 = vadd.f32 %v199, 1.0
    %v256 = vadd.f32 %v201, 1.0
    %v257 = vadd.f32 %v203, 1.0
    %v258 = vadd.f32 %v205, 1.0
    %v259 = vadd.f32 %v207, 1.0
    %v260 = vadd.f32 %v209, 1.0
    %v261 = vadd.f32 %v211, 1.0
    %v262 = vadd.f32 %v213, 1.0
    %v263 = vadd.f32 %v215, 1.0
    %v264 = vadd.f32 %v217, 1.0
    %v265 = vadd.f32 %v219, 1.0
    %v266 = vadd.f32 %v221, 1.0
    %v267 = vadd.f32 %v223, 1.0
    %v268 = vadd.f32 %v225, 1.0
    %v269 = vadd.f32 %v227, 1.0
    %v270 = vadd.f32 %v229, 1.0
    %v271 = vadd.f32 %v231, 1.0
    %v272 = vadd.f32 %v233, 1.0
    %v273 = vadd.f32 %v235, 1.0
    %v274 = vadd.f32 %v237, 1.0
    %v275 = vadd.f32 %v239, 1.0
    %v276 = vadd.f32 %v241, 1.0
    %v277 = vadd.f32 %v243, 1.0
    %v278 = vadd.f32 %v245, 1.0
    %v279 = vadd.f32 %v247, 1.0
    %v280 = vlog2.pop %v248
    %v281 = vmul.f32 %v280, 0.6931472
    %v282 = vlog2.pop %v249
    %v283 = vmul.f32 %v282, 0.6931472
    %v284 = vlog2.pop %v250
    %v285 = vmul.f32 %v284, 0.6931472
    %v286 = vlog2.pop %v251
    %v287 = vmul.f32 %v286, 0.6931472
    %v288 = vlog2.pop %v252
    %v289 = vmul.f32 %v288, 0.6931472
    %v290 = vlog2.pop %v253
    %v291 = vmul.f32 %v290, 0.6931472
    %v292 = vlog2.pop %v254
    %v293 = vmul.f32 %v292, 0.6931472
    %v294 = vlog2.pop %v255
    %v295 = vmul.f32 %v294, 0.6931472
    %v296 = vlog2.pop %v256
    %v297 = vmul.f32 %v296, 0.6931472
    %v298 = vlog2.pop %v257
    %v299 = vmul.f32 %v298, 0.6931472
    %v300 = vlog2.pop %v258
    %v301 = vmul.f32 %v300, 0.6931472
    %v302 = vlog2.pop %v259
    %v303 = vmul.f32 %v302, 0.6931472
    %v304 = vlog2.pop %v260
    %v305 = vmul.f32 %v304, 0.6931472
    %v306 = vlog2.pop %v261
    %v307 = vmul.f32 %v306, 0.6931472
    %v308 = vlog2.pop %v262
    %v309 = vmul.f32 %v308, 0.6931472
    %v310 = vlog2.pop %v263
    %v311 = vmul.f32 %v310, 0.6931472
    %v312 = vlog2.pop %v264
    %v313 = vmul.f32 %v312, 0.6931472
    %v314 = vlog2.pop %v265
    %v315 = vmul.f32 %v314, 0.6931472
    %v316 = vlog2.pop %v266
    %v317 = vmul.f32 %v316, 0.6931472
    %v318 = vlog2.pop %v267
    %v319 = vmul.f32 %v318, 0.6931472
    %v320 = vlog2.pop %v268
    %v321 = vmul.f32 %v320, 0.6931472
    %v322 = vlog2.pop %v269
    %v323 = vmul.f32 %v322, 0.6931472
    %v324 = vlog2.pop %v270
    %v325 = vmul.f32 %v324, 0.6931472
    %v326 = vlog2.pop %v271
    %v327 = vmul.f32 %v326, 0.6931472
    %v328 = vlog2.pop %v272
    %v329 = vmul.f32 %v328, 0.6931472
    %v330 = vlog2.pop %v273
    %v331 = vmul.f32 %v330, 0.6931472
    %v332 = vlog2.pop %v274
    %v333 = vmul.f32 %v332, 0.6931472
    %v334 = vlog2.pop %v275
    %v335 = vmul.f32 %v334, 0.6931472
    %v336 = vlog2.pop %v276
    %v337 = vmul.f32 %v336, 0.6931472
    %v338 = vlog2.pop %v277
    %v339 = vmul.f32 %v338, 0.6931472
    %v340 = vlog2.pop %v278
    %v341 = vmul.f32 %v340, 0.6931472
    %v342 = vlog2.pop %v279
    %v343 = vmul.f32 %v342, 0.6931472
    %v344 = vsel %vm120, %v88, %v281
    %v345 = vsel %vm121, %v89, %v283
    %v346 = vsel %vm122, %v90, %v285
    %v347 = vsel %vm123, %v91, %v287
    %v348 = vsel %vm124, %v92, %v289
    %v349 = vsel %vm125, %v93, %v291
    %v350 = vsel %vm126, %v94, %v293
    %v351 = vsel %vm127, %v95, %v295
    %v352 = vsel %vm128, %v96, %v297
    %v353 = vsel %vm129, %v97, %v299
    %v354 = vsel %vm130, %v98, %v301
    %v355 = vsel %vm131, %v99, %v303
    %v356 = vsel %vm132, %v100, %v305
    %v357 = vsel %vm133, %v101, %v307
    %v358 = vsel %vm134, %v102, %v309
    %v359 = vsel %vm135, %v103, %v311
    %v360 = vsel %vm136, %v104, %v313
    %v361 = vsel %vm137, %v105, %v315
    %v362 = vsel %vm138, %v106, %v317
    %v363 = vsel %vm139, %v107, %v319
    %v364 = vsel %vm140, %v108, %v321
    %v365 = vsel %vm141, %v109, %v323
    %v366 = vsel %vm142, %v110, %v325
    %v367 = vsel %vm143, %v111, %v327
    %v368 = vsel %vm144, %v112, %v329
    %v369 = vsel %vm145, %v113, %v331
    %v370 = vsel %vm146, %v114, %v333
    %v371 = vsel %vm147, %v115, %v335
    %v372 = vsel %vm148, %v116, %v337
    %v373 = vsel %vm149, %v117, %v339
    %v374 = vsel %vm150, %v118, %v341
    %v375 = vsel %vm151, %v119, %v343
    %v376 = vadd.f32 %v344, 1e-06
    %v377 = vadd.f32 %v345, 1e-06
    %v378 = vadd.f32 %v346, 1e-06
    %v379 = vadd.f32 %v347, 1e-06
    %v380 = vadd.f32 %v348, 1e-06
    %v381 = vadd.f32 %v349, 1e-06
    %v382 = vadd.f32 %v350, 1e-06
    %v383 = vadd.f32 %v351, 1e-06
    %v384 = vadd.f32 %v352, 1e-06
    %v385 = vadd.f32 %v353, 1e-06
    %v386 = vadd.f32 %v354, 1e-06
    %v387 = vadd.f32 %v355, 1e-06
    %v388 = vadd.f32 %v356, 1e-06
    %v389 = vadd.f32 %v357, 1e-06
    %v390 = vadd.f32 %v358, 1e-06
    %v391 = vadd.f32 %v359, 1e-06
    %v392 = vadd.f32 %v360, 1e-06
    %v393 = vadd.f32 %v361, 1e-06
    %v394 = vadd.f32 %v362, 1e-06
    %v395 = vadd.f32 %v363, 1e-06
    %v396 = vadd.f32 %v364, 1e-06
    %v397 = vadd.f32 %v365, 1e-06
    %v398 = vadd.f32 %v366, 1e-06
    %v399 = vadd.f32 %v367, 1e-06
    %v400 = vadd.f32 %v368, 1e-06
    %v401 = vadd.f32 %v369, 1e-06
    %v402 = vadd.f32 %v370, 1e-06
    %v403 = vadd.f32 %v371, 1e-06
    %v404 = vadd.f32 %v372, 1e-06
    %v405 = vadd.f32 %v373, 1e-06
    %v406 = vadd.f32 %v374, 1e-06
    %v407 = vadd.f32 %v375, 1e-06
    %v408 = vld [vmem:[#allocation10] sm:$0xff]
    %v409 = vld [vmem:[#allocation10 + $0x8] sm:$0xff]
    %v410 = vld [vmem:[#allocation10 + $0x10] sm:$0xff]
    %v411 = vld [vmem:[#allocation10 + $0x18] sm:$0xff]
    %v412 = vld [vmem:[#allocation10 + $0x20] sm:$0xff]
    %v413 = vld [vmem:[#allocation10 + $0x28] sm:$0xff]
    %v414 = vld [vmem:[#allocation10 + $0x30] sm:$0xff]
    %v415 = vld [vmem:[#allocation10 + $0x38] sm:$0xff]
    %v416 = vld [vmem:[#allocation10 + $0x40] sm:$0xff]
    %v417 = vld [vmem:[#allocation10 + $0x48] sm:$0xff]
    %v418 = vld [vmem:[#allocation10 + $0x50] sm:$0xff]
    %v419 = vld [vmem:[#allocation10 + $0x58] sm:$0xff]
    %v420 = vld [vmem:[#allocation10 + $0x60] sm:$0xff]
    %v421 = vld [vmem:[#allocation10 + $0x68] sm:$0xff]
    %v422 = vld [vmem:[#allocation10 + $0x70] sm:$0xff]
    %v423 = vld [vmem:[#allocation10 + $0x78] sm:$0xff]
    %v424 = vld [vmem:[#allocation10 + $0x80] sm:$0xff]
    %v425 = vld [vmem:[#allocation10 + $0x88] sm:$0xff]
    %v426 = vld [vmem:[#allocation10 + $0x90] sm:$0xff]
    %v427 = vld [vmem:[#allocation10 + $0x98] sm:$0xff]
    %v428 = vld [vmem:[#allocation10 + $0xa0] sm:$0xff]
    %v429 = vld [vmem:[#allocation10 + $0xa8] sm:$0xff]
    %v430 = vld [vmem:[#allocation10 + $0xb0] sm:$0xff]
    %v431 = vld [vmem:[#allocation10 + $0xb8] sm:$0xff]
    %v432 = vld [vmem:[#allocation10 + $0xc0] sm:$0xff]
    %v433 = vld [vmem:[#allocation10 + $0xc8] sm:$0xff]
    %v434 = vld [vmem:[#allocation10 + $0xd0] sm:$0xff]
    %v435 = vld [vmem:[#allocation10 + $0xd8] sm:$0xff]
    %v436 = vld [vmem:[#allocation10 + $0xe0] sm:$0xff]
    %v437 = vld [vmem:[#allocation10 + $0xe8] sm:$0xff]
    %v438 = vld [vmem:[#allocation10 + $0xf0] sm:$0xff]
    %v439 = vld [vmem:[#allocation10 + $0xf8] sm:$0xff]
    %v440 = vld [vmem:[#allocation7] sm:$0xff]
    %v441 = vld [vmem:[#allocation7 + $0x8] sm:$0xff]
    %v442 = vld [vmem:[#allocation7 + $0x10] sm:$0xff]
    %v443 = vld [vmem:[#allocation7 + $0x18] sm:$0xff]
    %v444 = vld [vmem:[#allocation7 + $0x20] sm:$0xff]
    %v445 = vld [vmem:[#allocation7 + $0x28] sm:$0xff]
    %v446 = vld [vmem:[#allocation7 + $0x30] sm:$0xff]
    %v447 = vld [vmem:[#allocation7 + $0x38] sm:$0xff]
    %v448 = vld [vmem:[#allocation7 + $0x40] sm:$0xff]
    %v449 = vld [vmem:[#allocation7 + $0x48] sm:$0xff]
    %v450 = vld [vmem:[#allocation7 + $0x50] sm:$0xff]
    %v451 = vld [vmem:[#allocation7 + $0x58] sm:$0xff]
    %v452 = vld [vmem:[#allocation7 + $0x60] sm:$0xff]
    %v453 = vld [vmem:[#allocation7 + $0x68] sm:$0xff]
    %v454 = vld [vmem:[#allocation7 + $0x70] sm:$0xff]
    %v455 = vld [vmem:[#allocation7 + $0x78] sm:$0xff]
    %v456 = vld [vmem:[#allocation7 + $0x80] sm:$0xff]
    %v457 = vld [vmem:[#allocation7 + $0x88] sm:$0xff]
    %v458 = vld [vmem:[#allocation7 + $0x90] sm:$0xff]
    %v459 = vld [vmem:[#allocation7 + $0x98] sm:$0xff]
    %v460 = vld [vmem:[#allocation7 + $0xa0] sm:$0xff]
    %v461 = vld [vmem:[#allocation7 + $0xa8] sm:$0xff]
    %v462 = vld [vmem:[#allocation7 + $0xb0] sm:$0xff]
    %v463 = vld [vmem:[#allocation7 + $0xb8] sm:$0xff]
    %v464 = vld [vmem:[#allocation7 + $0xc0] sm:$0xff]
    %v465 = vld [vmem:[#allocation7 + $0xc8] sm:$0xff]
    %v466 = vld [vmem:[#allocation7 + $0xd0] sm:$0xff]
    %v467 = vld [vmem:[#allocation7 + $0xd8] sm:$0xff]
    %v468 = vld [vmem:[#allocation7 + $0xe0] sm:$0xff]
    %v469 = vld [vmem:[#allocation7 + $0xe8] sm:$0xff]
    %v470 = vld [vmem:[#allocation7 + $0xf0] sm:$0xff]
    %v471 = vld [vmem:[#allocation7 + $0xf8] sm:$0xff]
    %v472 = vmul.f32 %v376, %v408
    %v473 = vmul.f32 %v377, %v409
    %v474 = vmul.f32 %v378, %v410
    %v475 = vmul.f32 %v379, %v411
    %v476 = vmul.f32 %v380, %v412
    %v477 = vmul.f32 %v381, %v413
    %v478 = vmul.f32 %v382, %v414
    %v479 = vmul.f32 %v383, %v415
    %v480 = vmul.f32 %v384, %v416
    %v481 = vmul.f32 %v385, %v417
    %v482 = vmul.f32 %v386, %v418
    %v483 = vmul.f32 %v387, %v419
    %v484 = vmul.f32 %v388, %v420
    %v485 = vmul.f32 %v389, %v421
    %v486 = vmul.f32 %v390, %v422
    %v487 = vmul.f32 %v391, %v423
    %v488 = vmul.f32 %v392, %v424
    %v489 = vmul.f32 %v393, %v425
    %v490 = vmul.f32 %v394, %v426
    %v491 = vmul.f32 %v395, %v427
    %v492 = vmul.f32 %v396, %v428
    %v493 = vmul.f32 %v397, %v429
    %v494 = vmul.f32 %v398, %v430
    %v495 = vmul.f32 %v399, %v431
    %v496 = vmul.f32 %v400, %v432
    %v497 = vmul.f32 %v401, %v433
    %v498 = vmul.f32 %v402, %v434
    %v499 = vmul.f32 %v403, %v435
    %v500 = vmul.f32 %v404, %v436
    %v501 = vmul.f32 %v405, %v437
    %v502 = vmul.f32 %v406, %v438
    %v503 = vmul.f32 %v407, %v439
    %v504 = vadd.f32 %v440, %v472
    %v505 = vadd.f32 %v441, %v473
    %v506 = vadd.f32 %v442, %v474
    %v507 = vadd.f32 %v443, %v475
    %v508 = vadd.f32 %v444, %v476
    %v509 = vadd.f32 %v445, %v477
    %v510 = vadd.f32 %v446, %v478
    %v511 = vadd.f32 %v447, %v479
    %v512 = vadd.f32 %v448, %v480
    %v513 = vadd.f32 %v449, %v481
    %v514 = vadd.f32 %v450, %v482
    %v515 = vadd.f32 %v451, %v483
    %v516 = vadd.f32 %v452, %v484
    %v517 = vadd.f32 %v453, %v485
    %v518 = vadd.f32 %v454, %v486
    %v519 = vadd.f32 %v455, %v487
    %v520 = vadd.f32 %v456, %v488
    %v521 = vadd.f32 %v457, %v489
    %v522 = vadd.f32 %v458, %v490
    %v523 = vadd.f32 %v459, %v491
    %v524 = vadd.f32 %v460, %v492
    %v525 = vadd.f32 %v461, %v493
    %v526 = vadd.f32 %v462, %v494
    %v527 = vadd.f32 %v463, %v495
    %v528 = vadd.f32 %v464, %v496
    %v529 = vadd.f32 %v465, %v497
    %v530 = vadd.f32 %v466, %v498
    %v531 = vadd.f32 %v467, %v499
    %v532 = vadd.f32 %v468, %v500
    %v533 = vadd.f32 %v469, %v501
    %v534 = vadd.f32 %v470, %v502
    %v535 = vadd.f32 %v471, %v503
    %p536 = scmp.eq.s32.totalorder 0, 0
    // Predicated region
    $region46: #{tpu_custom_call.1} parent=1 // pred_check
      %p537 = pneg %p536
    $region47: #{tpu_custom_call.1} parent=1 // pred_check_branch
      %539 = sbr.rel (%p537) target = $region49
    $region48: #{tpu_custom_call.1} parent=1 // pred_region
      %540 = vst [vmem:[#allocation2] sm:$0xff] 0.0
      %541 = vst [vmem:[#allocation2 + $0x8] sm:$0xff] 0.0
      %542 = vst [vmem:[#allocation2 + $0x10] sm:$0xff] 0.0
      %543 = vst [vmem:[#allocation2 + $0x18] sm:$0xff] 0.0
    $region49: #{tpu_custom_call.1} parent=1 // pred_fallthru
      _
    %v544 = vld [vmem:[#allocation2] sm:$0xff]
    %v545 = vld [vmem:[#allocation2 + $0x8] sm:$0xff]
    %v546 = vld [vmem:[#allocation2 + $0x10] sm:$0xff]
    %v547 = vld [vmem:[#allocation2 + $0x18] sm:$0xff]
    %v548 = vld [vmem:[#allocation3] sm:$0xff]
    %v549 = vld [vmem:[#allocation3 + $0x8] sm:$0xff]
    %v550 = vld [vmem:[#allocation3 + $0x10] sm:$0xff]
    %v551 = vld [vmem:[#allocation3 + $0x18] sm:$0xff]
    %v552 = vpack.c.bf16 %v505, %v504
    %v553 = vpack.c.bf16 %v507, %v506
    %v554 = vpack.c.bf16 %v509, %v508
    %v555 = vpack.c.bf16 %v511, %v510
    %v556 = vpack.c.bf16 %v513, %v512
    %v557 = vpack.c.bf16 %v515, %v514
    %v558 = vpack.c.bf16 %v517, %v516
    %v559 = vpack.c.bf16 %v519, %v518
    %v560 = vpack.c.bf16 %v521, %v520
    %v561 = vpack.c.bf16 %v523, %v522
    %v562 = vpack.c.bf16 %v525, %v524
    %v563 = vpack.c.bf16 %v527, %v526
    %v564 = vpack.c.bf16 %v529, %v528
    %v565 = vpack.c.bf16 %v531, %v530
    %v566 = vpack.c.bf16 %v533, %v532
    %v567 = vpack.c.bf16 %v535, %v534
    %v572 = vunpack.c.l.b16 %v548
    %v573 = vunpack.c.h.b16 %v548
    %v574 = vunpack.c.l.b16 %v549
    %v575 = vunpack.c.h.b16 %v549
    %v576 = vunpack.c.l.b16 %v550
    %v577 = vunpack.c.h.b16 %v550
    %v578 = vunpack.c.l.b16 %v551
    %v579 = vunpack.c.h.b16 %v551
    %v580 = vpack.c.b16 %v574, %v572
    %v581 = vpack.c.b16 %v575, %v573
    %v582 = vpack.c.b16 %v578, %v576
    %v583 = vpack.c.b16 %v579, %v577
    %588 = vmatprep.subr.bf16.mxu0 0
    %589 = vmatpush1.bf16.msra.mxu0 %v552
    %590 = vmatprep.subr.bf16.mxu0 0
    %591 = vmatpush1.bf16.msra.mxu0 %v553
    %592 = vmatprep.subr.bf16.mxu0 0
    %593 = vmatpush1.bf16.msra.mxu0 %v554
    %594 = vmatprep.subr.bf16.mxu0 0
    %595 = vmatpush1.bf16.msra.mxu0 %v555
    %596 = vmatprep.subr.bf16.mxu0 0
    %597 = vmatpush1.bf16.msra.mxu0 %v556
    %598 = vmatprep.subr.bf16.mxu0 0
    %599 = vmatpush1.bf16.msra.mxu0 %v557
    %600 = vmatprep.subr.bf16.mxu0 0
    %601 = vmatpush1.bf16.msra.mxu0 %v558
    %602 = vmatprep.subr.bf16.mxu0 0
    %603 = vmatpush1.bf16.msra.mxu0 %v559
    %604 = vmatprep.subr.bf16.mxu0 0
    %605 = vmatpush1.bf16.msra.mxu0 %v560
    %606 = vmatprep.subr.bf16.mxu0 0
    %607 = vmatpush1.bf16.msra.mxu0 %v561
    %608 = vmatprep.subr.bf16.mxu0 0
    %609 = vmatpush1.bf16.msra.mxu0 %v562
    %610 = vmatprep.subr.bf16.mxu0 0
    %611 = vmatpush1.bf16.msra.mxu0 %v563
    %612 = vmatprep.subr.bf16.mxu0 0
    %613 = vmatpush1.bf16.msra.mxu0 %v564
    %614 = vmatprep.subr.bf16.mxu0 0
    %615 = vmatpush1.bf16.msra.mxu0 %v565
    %616 = vmatprep.subr.bf16.mxu0 0
    %617 = vmatpush1.bf16.msra.mxu0 %v566
    %618 = vmatprep.subr.bf16.mxu0 0
    %619 = vmatpush1.bf16.msra.mxu0 %v567
    %620 = vmatprep.mubr.bf16.mxu0 %v581
    %621 = vmatmul.mubr.bf16.gmra.mrb[0].mxu0 %v580
    %v622 = vpop.f32.mrb[0].mxu0
    %v623 = vadd.f32 0.0, %v622
    %v624 = vpop.f32.mrb[0].mxu0
    %v625 = vpop.f32.mrb[0].mxu0
    %v626 = vadd.f32 0.0, %v625
    %v627 = vpop.f32.mrb[0].mxu0
    %628 = vmatprep.mubr.bf16.mxu0 %v583
    %629 = vmatmul.mubr.bf16.gmra.mrb[0].mxu0 %v582
    %v630 = vpop.f32.mrb[0].mxu0
    %v631 = vadd.f32 0.0, %v630
    %v632 = vpop.f32.mrb[0].mxu0
    %v633 = vpop.f32.mrb[0].mxu0
    %v634 = vadd.f32 0.0, %v633
    %v635 = vpop.f32.mrb[0].mxu0
    %636 = vdwg.mxu0
    %v637 = vadd.f32 %v544, %v623
    %v638 = vadd.f32 %v545, %v626
    %v639 = vadd.f32 %v546, %v631
    %v640 = vadd.f32 %v547, %v634
    %641 = vst [vmem:[#allocation2] sm:$0xff] %v637
    %642 = vst [vmem:[#allocation2 + $0x8] sm:$0xff] %v638
    %643 = vst [vmem:[#allocation2 + $0x10] sm:$0xff] %v639
    %644 = vst [vmem:[#allocation2 + $0x18] sm:$0xff] %v640
    %p645 = scmp.eq.s32.totalorder 0, 0
    // Predicated region
    $region50: #{tpu_custom_call.1} parent=1 // pred_check
      %p646 = pneg %p645
    $region51: #{tpu_custom_call.1} parent=1 // pred_check_branch
      %648 = sbr.rel (%p646) target = $region53
    $region52: #{tpu_custom_call.1} parent=1 // pred_region
      %v649 = vlog2.pop %v376
      %v650 = vmul.f32 %v649, 0.6931472
      %v651 = vlog2.pop %v377
      %v652 = vmul.f32 %v651, 0.6931472
      %v653 = vlog2.pop %v378
      %v654 = vmul.f32 %v653, 0.6931472
      %v655 = vlog2.pop %v379
      %v656 = vmul.f32 %v655, 0.6931472
      %v657 = vlog2.pop %v380
      %v658 = vmul.f32 %v657, 0.6931472
      %v659 = vlog2.pop %v381
      %v660 = vmul.f32 %v659, 0.6931472
      %v661 = vlog2.pop %v382
      %v662 = vmul.f32 %v661, 0.6931472
      %v663 = vlog2.pop %v383
      %v664 = vmul.f32 %v663, 0.6931472
      %v665 = vlog2.pop %v384
      %v666 = vmul.f32 %v665, 0.6931472
      %v667 = vlog2.pop %v385
      %v668 = vmul.f32 %v667, 0.6931472
      %v669 = vlog2.pop %v386
      %v670 = vmul.f32 %v669, 0.6931472
      %v671 = vlog2.pop %v387
      %v672 = vmul.f32 %v671, 0.6931472
      %v673 = vlog2.pop %v388
      %v674 = vmul.f32 %v673, 0.6931472
      %v675 = vlog2.pop %v389
      %v676 = vmul.f32 %v675, 0.6931472
      %v677 = vlog2.pop %v390
      %v678 = vmul.f32 %v677, 0.6931472
      %v679 = vlog2.pop %v391
      %v680 = vmul.f32 %v679, 0.6931472
      %v681 = vlog2.pop %v392
      %v682 = vmul.f32 %v681, 0.6931472
      %v683 = vlog2.pop %v393
      %v684 = vmul.f32 %v683, 0.6931472
      %v685 = vlog2.pop %v394
      %v686 = vmul.f32 %v685, 0.6931472
      %v687 = vlog2.pop %v395
      %v688 = vmul.f32 %v687, 0.6931472
      %v689 = vlog2.pop %v396
      %v690 = vmul.f32 %v689, 0.6931472
      %v691 = vlog2.pop %v397
      %v692 = vmul.f32 %v691, 0.6931472
      %v693 = vlog2.pop %v398
      %v694 = vmul.f32 %v693, 0.6931472
      %v695 = vlog2.pop %v399
      %v696 = vmul.f32 %v695, 0.6931472
      %v697 = vlog2.pop %v400
      %v698 = vmul.f32 %v697, 0.6931472
      %v699 = vlog2.pop %v401
      %v700 = vmul.f32 %v699, 0.6931472
      %v701 = vlog2.pop %v402
      %v702 = vmul.f32 %v701, 0.6931472
      %v703 = vlog2.pop %v403
      %v704 = vmul.f32 %v703, 0.6931472
      %v705 = vlog2.pop %v404
      %v706 = vmul.f32 %v705, 0.6931472
      %v707 = vlog2.pop %v405
      %v708 = vmul.f32 %v707, 0.6931472
      %v709 = vlog2.pop %v406
      %v710 = vmul.f32 %v709, 0.6931472
      %v711 = vlog2.pop %v407
      %v712 = vmul.f32 %v711, 0.6931472
      %v713 = vadd.f32 %v650, %v652
      %v714 = vadd.f32 %v713, %v654
      %v715 = vadd.f32 %v714, %v656
      %v716 = vadd.f32 %v715, %v658
      %v717 = vadd.f32 %v716, %v660
      %v718 = vadd.f32 %v717, %v662
      %v719 = vadd.f32 %v718, %v664
      %v720 = vadd.f32 %v719, %v666
      %v721 = vadd.f32 %v720, %v668
      %v722 = vadd.f32 %v721, %v670
      %v723 = vadd.f32 %v722, %v672
      %v724 = vadd.f32 %v723, %v674
      %v725 = vadd.f32 %v724, %v676
      %v726 = vadd.f32 %v725, %v678
      %v727 = vadd.f32 %v726, %v680
      %v728 = vadd.f32 %v727, %v682
      %v729 = vadd.f32 %v728, %v684
      %v730 = vadd.f32 %v729, %v686
      %v731 = vadd.f32 %v730, %v688
      %v732 = vadd.f32 %v731, %v690
      %v733 = vadd.f32 %v732, %v692
      %v734 = vadd.f32 %v733, %v694
      %v735 = vadd.f32 %v734, %v696
      %v736 = vadd.f32 %v735, %v698
      %v737 = vadd.f32 %v736, %v700
      %v738 = vadd.f32 %v737, %v702
      %v739 = vadd.f32 %v738, %v704
      %v740 = vadd.f32 %v739, %v706
      %v741 = vadd.f32 %v740, %v708
      %v742 = vadd.f32 %v741, %v710
      %v743 = vadd.f32 %v742, %v712
      %744 = vadd.xlane.f32.xlu0 %v743
      %v745 = vpop.xlane.xlu0 %744
      %v746 = vrot.slane %v745, 4
      %v747 = vadd.f32 %v745, %v746
      %v748 = vrot.slane %v747, 2
      %v749 = vadd.f32 %v747, %v748
      %v750 = vrot.slane %v749, 1
      %v751 = vadd.f32 %v749, %v750
      %s752 = vtos %v751
      %s753 = ssub.f32 -30111.777, %s752
      %v754 = vmul.f32 %v408, %v408
      %v755 = vmul.f32 %v409, %v409
      %v756 = vmul.f32 %v410, %v410
      %v757 = vmul.f32 %v411, %v411
      %v758 = vmul.f32 %v412, %v412
      %v759 = vmul.f32 %v413, %v413
      %v760 = vmul.f32 %v414, %v414
      %v761 = vmul.f32 %v415, %v415
      %v762 = vmul.f32 %v416, %v416
      %v763 = vmul.f32 %v417, %v417
      %v764 = vmul.f32 %v418, %v418
      %v765 = vmul.f32 %v419, %v419
      %v766 = vmul.f32 %v420, %v420
      %v767 = vmul.f32 %v421, %v421
      %v768 = vmul.f32 %v422, %v422
      %v769 = vmul.f32 %v423, %v423
      %v770 = vmul.f32 %v424, %v424
      %v771 = vmul.f32 %v425, %v425
      %v772 = vmul.f32 %v426, %v426
      %v773 = vmul.f32 %v427, %v427
      %v774 = vmul.f32 %v428, %v428
      %v775 = vmul.f32 %v429, %v429
      %v776 = vmul.f32 %v430, %v430
      %v777 = vmul.f32 %v431, %v431
      %v778 = vmul.f32 %v432, %v432
      %v779 = vmul.f32 %v433, %v433
      %v780 = vmul.f32 %v434, %v434
      %v781 = vmul.f32 %v435, %v435
      %v782 = vmul.f32 %v436, %v436
      %v783 = vmul.f32 %v437, %v437
      %v784 = vmul.f32 %v438, %v438
      %v785 = vmul.f32 %v439, %v439
      %v786 = vadd.f32 %v754, %v755
      %v787 = vadd.f32 %v786, %v756
      %v788 = vadd.f32 %v787, %v757
      %v789 = vadd.f32 %v788, %v758
      %v790 = vadd.f32 %v789, %v759
      %v791 = vadd.f32 %v790, %v760
      %v792 = vadd.f32 %v791, %v761
      %v793 = vadd.f32 %v792, %v762
      %v794 = vadd.f32 %v793, %v763
      %v795 = vadd.f32 %v794, %v764
      %v796 = vadd.f32 %v795, %v765
      %v797 = vadd.f32 %v796, %v766
      %v798 = vadd.f32 %v797, %v767
      %v799 = vadd.f32 %v798, %v768
      %v800 = vadd.f32 %v799, %v769
      %v801 = vadd.f32 %v800, %v770
      %v802 = vadd.f32 %v801, %v771
      %v803 = vadd.f32 %v802, %v772
      %v804 = vadd.f32 %v803, %v773
      %v805 = vadd.f32 %v804, %v774
      %v806 = vadd.f32 %v805, %v775
      %v807 = vadd.f32 %v806, %v776
      %v808 = vadd.f32 %v807, %v777
      %v809 = vadd.f32 %v808, %v778
      %v810 = vadd.f32 %v809, %v779
      %v811 = vadd.f32 %v810, %v780
      %v812 = vadd.f32 %v811, %v781
      %v813 = vadd.f32 %v812, %v782
      %v814 = vadd.f32 %v813, %v783
      %v815 = vadd.f32 %v814, %v784
      %v816 = vadd.f32 %v815, %v785
      %817 = vadd.xlane.f32.xlu0 %v816
      %v818 = vpop.xlane.xlu0 %817
      %v819 = vrot.slane %v818, 4
      %v820 = vadd.f32 %v818, %v819
      %v821 = vrot.slane %v820, 2
      %v822 = vadd.f32 %v820, %v821
      %v823 = vrot.slane %v822, 1
      %v824 = vadd.f32 %v822, %v823
      %s825 = vtos %v824
      %s826 = smul.f32 %s825, 0.5
      %s827 = ssub.f32 %s753, %s826
      %s828 = sadd.s32 0, 0
      %s829 = scalar_lea.smem [#allocation13], %s828
      %830 = sst [smem:[%s829]] %s827
      %v831 = vmul.f32 %v504, %v504
      %v832 = vmul.f32 %v505, %v505
      %v833 = vmul.f32 %v506, %v506
      %v834 = vmul.f32 %v507, %v507
      %v835 = vmul.f32 %v508, %v508
      %v836 = vmul.f32 %v509, %v509
      %v837 = vmul.f32 %v510, %v510
      %v838 = vmul.f32 %v511, %v511
      %v839 = vmul.f32 %v512, %v512
      %v840 = vmul.f32 %v513, %v513
      %v841 = vmul.f32 %v514, %v514
      %v842 = vmul.f32 %v515, %v515
      %v843 = vmul.f32 %v516, %v516
      %v844 = vmul.f32 %v517, %v517
      %v845 = vmul.f32 %v518, %v518
      %v846 = vmul.f32 %v519, %v519
      %v847 = vmul.f32 %v520, %v520
      %v848 = vmul.f32 %v521, %v521
      %v849 = vmul.f32 %v522, %v522
      %v850 = vmul.f32 %v523, %v523
      %v851 = vmul.f32 %v524, %v524
      %v852 = vmul.f32 %v525, %v525
      %v853 = vmul.f32 %v526, %v526
      %v854 = vmul.f32 %v527, %v527
      %v855 = vmul.f32 %v528, %v528
      %v856 = vmul.f32 %v529, %v529
      %v857 = vmul.f32 %v530, %v530
      %v858 = vmul.f32 %v531, %v531
      %v859 = vmul.f32 %v532, %v532
      %v860 = vmul.f32 %v533, %v533
      %v861 = vmul.f32 %v534, %v534
      %v862 = vmul.f32 %v535, %v535
      %v863 = vadd.f32 %v831, %v832
      %v864 = vadd.f32 %v863, %v833
      %v865 = vadd.f32 %v864, %v834
      %v866 = vadd.f32 %v865, %v835
      %v867 = vadd.f32 %v866, %v836
      %v868 = vadd.f32 %v867, %v837
      %v869 = vadd.f32 %v868, %v838
      %v870 = vadd.f32 %v869, %v839
      %v871 = vadd.f32 %v870, %v840
      %v872 = vadd.f32 %v871, %v841
      %v873 = vadd.f32 %v872, %v842
      %v874 = vadd.f32 %v873, %v843
      %v875 = vadd.f32 %v874, %v844
      %v876 = vadd.f32 %v875, %v845
      %v877 = vadd.f32 %v876, %v846
      %v878 = vadd.f32 %v877, %v847
      %v879 = vadd.f32 %v878, %v848
      %v880 = vadd.f32 %v879, %v849
      %v881 = vadd.f32 %v880, %v850
      %v882 = vadd.f32 %v881, %v851
      %v883 = vadd.f32 %v882, %v852
      %v884 = vadd.f32 %v883, %v853
      %v885 = vadd.f32 %v884, %v854
      %v886 = vadd.f32 %v885, %v855
      %v887 = vadd.f32 %v886, %v856
      %v888 = vadd.f32 %v887, %v857
      %v889 = vadd.f32 %v888, %v858
      %v890 = vadd.f32 %v889, %v859
      %v891 = vadd.f32 %v890, %v860
      %v892 = vadd.f32 %v891, %v861
      %v893 = vadd.f32 %v892, %v862
      %894 = vadd.xlane.f32.xlu0 %v893
      %v895 = vpop.xlane.xlu0 %894
      %v896 = vrot.slane %v895, 4
      %v897 = vadd.f32 %v895, %v896
      %v898 = vrot.slane %v897, 2
      %v899 = vadd.f32 %v897, %v898
      %v900 = vrot.slane %v899, 1
      %v901 = vadd.f32 %v899, %v900
      %s902 = vtos %v901
      %s903 = smul.f32 %s902, 50.0
      %s904 = ssub.f32 45339.332, %s903
      %s905 = scalar_lea.smem [#allocation14], %s828
      %906 = sst [smem:[%s905]] %s904
    $region53: #{tpu_custom_call.1} parent=1 // pred_fallthru
      _
    %p907 = pnand %p645, %p536
    %p908 = pneg %p907
    // Predicated region
    $region54: #{tpu_custom_call.1} parent=1 // pred_check
      _
    $region55: #{tpu_custom_call.1} parent=1 // pred_check_branch
      %910 = sbr.rel (%p907) target = $region57
    $region56: #{tpu_custom_call.1} parent=1 // pred_region
      %v911 = vld [vmem:[%s5] sm:$0x1]
      %vm912 = vcmp.gt.f32.partialorder %v911, 20.0
      %v913 = vmin.f32 %v911, 20.0
      %v914 = vmul.f32 %v913, 1.442695
      %v915 = vpow.pop %v914
      %v916 = vadd.f32 %v915, 1.0
      %v917 = vlog2.pop %v916
      %v918 = vmul.f32 %v917, 0.6931472
      %v919 = vsel %vm912, %v911, %v918
      %v920 = vadd.f32 %v919, 1e-06
      %v921 = vld [vmem:[%s6] sm:$0x1]
      %v922 = vld [vmem:[%s4] sm:$0x1]
      %v923 = vmul.f32 %v920, %v921
      %v924 = vadd.f32 %v922, %v923
      %s925 = sadd.s32 0, 1
      %v926 = vlog2.pop %v920
      %v927 = vmul.f32 %v926, 0.6931472
      %vm928 = vcmask 1040384
      %v929 = vsel %vm928, %v927, 0.0
      %930 = vadd.xlane.f32.xlu0 %v929
      %v931 = vpop.xlane.xlu0 %930
      %v932 = vrot.slane %v931, 4
      %v933 = vadd.f32 %v931, %v932
      %v934 = vrot.slane %v933, 2
      %v935 = vadd.f32 %v933, %v934
      %v936 = vrot.slane %v935, 1
      %v937 = vadd.f32 %v935, %v936
      %s938 = vtos %v937
      %s939 = ssub.f32 -117.62413, %s938
      %v940 = vmul.f32 %v921, %v921
      %v941 = vsel %vm928, %v940, 0.0
      %942 = vadd.xlane.f32.xlu0 %v941
      %v943 = vpop.xlane.xlu0 %942
      %v944 = vrot.slane %v943, 4
      %v945 = vadd.f32 %v943, %v944
      %v946 = vrot.slane %v945, 2
      %v947 = vadd.f32 %v945, %v946
      %v948 = vrot.slane %v947, 1
      %v949 = vadd.f32 %v947, %v948
      %s950 = vtos %v949
      %s951 = smul.f32 %s950, 0.5
      %s952 = ssub.f32 %s939, %s951
      %s953 = scalar_lea.smem [#allocation13], %s925
      %954 = sst [smem:[%s953]] %s952
      %v955 = vmul.f32 %v924, %v924
      %v956 = vsel %vm928, %v955, 0.0
      %957 = vadd.xlane.f32.xlu0 %v956
      %v958 = vpop.xlane.xlu0 %957
      %v959 = vrot.slane %v958, 4
      %v960 = vadd.f32 %v958, %v959
      %v961 = vrot.slane %v960, 2
      %v962 = vadd.f32 %v960, %v961
      %v963 = vrot.slane %v962, 1
      %v964 = vadd.f32 %v962, %v963
      %s965 = vtos %v964
      %s966 = smul.f32 %s965, 50.0
      %s967 = ssub.f32 177.10677, %s966
      %s968 = scalar_lea.smem [#allocation14], %s925
      %969 = sst [smem:[%s968]] %s967
    $region57: #{tpu_custom_call.1} parent=1 // pred_fallthru
      _
    // Predicated region
    $region58: #{tpu_custom_call.1} parent=1 // pred_check
      %p970 = pneg %p536
    $region59: #{tpu_custom_call.1} parent=1 // pred_check_branch
      %972 = sbr.rel (%p970) target = $region61
    $region60: #{tpu_custom_call.1} parent=1 // pred_region
      %v973 = vld [vmem:[%s5] sm:$0x1]
      %vm974 = vcmp.gt.f32.partialorder %v973, 20.0
      %v975 = vmin.f32 %v973, 20.0
      %v976 = vmul.f32 %v975, 1.442695
      %v977 = vpow.pop %v976
      %v978 = vadd.f32 %v977, 1.0
      %v979 = vlog2.pop %v978
      %v980 = vmul.f32 %v979, 0.6931472
      %v981 = vsel %vm974, %v973, %v980
      %v982 = vadd.f32 %v981, 1e-06
      %v983 = vld [vmem:[%s4] sm:$0x1]
      %v984 = vld [vmem:[%s6] sm:$0x1]
      %v985 = vmul.f32 %v982, %v984
      %v986 = vadd.f32 %v983, %v985
      %v987 = vld [vmem:[#allocation2] sm:$0xff]
      %v988 = vld [vmem:[#allocation2 + $0x8] sm:$0xff]
      %v989 = vld [vmem:[#allocation2 + $0x10] sm:$0xff]
      %v990 = vld [vmem:[#allocation2 + $0x18] sm:$0xff]
      %v992 = vlaneseq
      %v993 = vshrl.u32 %v992, 7
      %v994 = vsub.s32 0, %v993
      %v995 = vrot.slane %v986, %v994
      %v997 = vadd.f32 %v987, %v995
      %v998 = vadd.f32 %v988, %v995
      %v999 = vadd.f32 %v989, %v995
      %v1000 = vadd.f32 %v990, %v995
      %1001 = vst [vmem:[#allocation12] sm:$0xff] %v997
      %1002 = vst [vmem:[#allocation12 + $0x8] sm:$0xff] %v998
      %1003 = vst [vmem:[#allocation12 + $0x10] sm:$0xff] %v999
      %1004 = vst [vmem:[#allocation12 + $0x18] sm:$0xff] %v1000
    $region61: #{tpu_custom_call.1} parent=1 // pred_fallthru
      _
    // Predicated region
    $region62: #{tpu_custom_call.1} parent=1 // pred_check
      _
    $region63: #{tpu_custom_call.1} parent=1 // pred_check_branch
      %1006 = sbr.rel (0) target = $region65
    $region64: #{tpu_custom_call.1} parent=1 // pred_region
      %s1008 = ssub.s32 512, 512
      %1009 = vsyncadd [#allocation5], %s1008
      %s1010 = sshll.u32 [#allocation12], 4
      %s1011 = int_to_ptr.vmem [resolvable:$true] %s1010
      %1016 = dma.vmem_to_hbm [thread:$0]  %s1011, 512, %s7, [#allocation5], 128, 128, 8
    $region65: #{tpu_custom_call.1} parent=1 // pred_fallthru
      _
    // Predicated region
    $region66: #{tpu_custom_call.1} parent=1 // pred_check
      _
    $region67: #{tpu_custom_call.1} parent=1 // pred_check_branch
      %1018 = sbr.rel (0) target = $region69
    $region68: #{tpu_custom_call.1} parent=1 // pred_region
      %s1020 = ssub.s32 16, 16
      %1021 = vsyncadd [#allocation6], %s1020
      %1024 = dma.smem_to_hbm [#allocation13], 16, %s8, [#allocation6]
    $region69: #{tpu_custom_call.1} parent=1 // pred_fallthru
      _
    // Predicated region
    $region70: #{tpu_custom_call.1} parent=1 // pred_check
      _
    $region71: #{tpu_custom_call.1} parent=1 // pred_check_branch
      %1026 = sbr.rel (0) target = $region73
    $region72: #{tpu_custom_call.1} parent=1 // pred_region
      %s1028 = ssub.s32 16, 16
      %1029 = vsyncadd [#allocation15], %s1028
      %1032 = dma.smem_to_hbm [#allocation14], 16, %s9, [#allocation15]
    $region73: #{tpu_custom_call.1} parent=1 // pred_fallthru
      _
    // Predicated region
    $region74: #{tpu_custom_call.1} parent=1 // pred_check
      _
    $region75: #{tpu_custom_call.1} parent=1 // pred_check_branch
      %1034 = sbr.rel (0) target = $region77
    $region76: #{tpu_custom_call.1} parent=1 // pred_region
      %1035 = dma.done [#allocation5], 512
    $region77: #{tpu_custom_call.1} parent=1 // pred_fallthru
      _
    // Predicated region
    $region78: #{tpu_custom_call.1} parent=1 // pred_check
      _
    $region79: #{tpu_custom_call.1} parent=1 // pred_check_branch
      %1037 = sbr.rel (0) target = $region81
    $region80: #{tpu_custom_call.1} parent=1 // pred_region
      %1038 = dma.done [#allocation6], 16
    $region81: #{tpu_custom_call.1} parent=1 // pred_fallthru
      _
    // Predicated region
    $region82: #{tpu_custom_call.1} parent=1 // pred_check
      _
    $region83: #{tpu_custom_call.1} parent=1 // pred_check_branch
      %1040 = sbr.rel (0) target = $region85
    $region84: #{tpu_custom_call.1} parent=1 // pred_region
      %1041 = dma.done [#allocation15], 16
    $region85: #{tpu_custom_call.1} parent=1 // pred_fallthru
      _
    %1042 = sfence
    %1043 = vsyncpa [#allocation4], 1
    %1044 = vsyncpa [#allocation8], 1
    %1045 = vsyncpa [#allocation11], 1
    %1046 = vsyncpa [#allocation5], 1
    %1047 = vsyncpa [#allocation6], 1
    %1048 = vsyncpa [#allocation15], 1

</llo_original>
